<compile_context>
chip_gen: v7x
topology: tpu7x:2x2x1
jax: 0.10.0
libtpu: 0.0.40
codegen_flags: <defaults>
</compile_context>

<pallas_src>
import functools

import numpy as np
import jax
import jax.numpy as jnp
from jax import lax
from jax.experimental import pallas as pl
from jax.experimental.pallas import tpu as pltpu

EPS = 1e-5  # torch.nn.LayerNorm default


def _layer_norm(x, w, b):
    mu = jnp.mean(x, axis=-1, keepdims=True)
    var = jnp.mean((x - mu) ** 2, axis=-1, keepdims=True)  # biased, like torch
    return (x - mu) * lax.rsqrt(var + EPS) * w + b


def _bf16(x):
    return x.astype(jnp.bfloat16)


def _model_kernel(x_ref, bias_ref,
                  ln1w, ln1b, wqkv, wp, bp, ln2w, ln2b, w1, b1, w2, b2,
                  lnfw, lnfb, wlm, blm,
                  o_ref,
                  *, num_layers, num_heads, head_size):
    BT, C = x_ref.shape
    H, hs = num_heads, head_size
    scale = float(C) ** -0.5            # reference scales by n_embd**-0.5 (C)

    bias = bias_ref[...]                # (BT, BT) block-diag causal bias (0 / -1e30)
    x = x_ref[...]                      # (B*T, C) f32 residual stream, resident

    for l in range(num_layers):         # static unroll; static weight indexing
        # ---- LN1 + fused multi-head causal self-attention -------------------
        xn = _layer_norm(x, ln1w[l], ln1b[l])
        qkv = jnp.dot(_bf16(xn), wqkv[l],              # one (BT,C)@(C,3C) matmul
                      preferred_element_type=jnp.float32)
        heads = []
        for h in range(H):              # static, tiny H; only the (T,T) part is per-head
            qh = qkv[:, h * hs:(h + 1) * hs]
            kh = qkv[:, C + h * hs:C + (h + 1) * hs]
            vh = qkv[:, 2 * C + h * hs:2 * C + (h + 1) * hs]
            # q @ k^T without materializing a transpose
            s = lax.dot_general(_bf16(qh), _bf16(kh),
                                (((1,), (1,)), ((), ())),
                                preferred_element_type=jnp.float32) * scale
            s = s + bias                               # causal + same-sequence mask
            s = s - jnp.max(s, axis=-1, keepdims=True)
            p = jnp.exp(s)
            p = p * pl.reciprocal(jnp.sum(p, axis=-1, keepdims=True), approx=True)
            heads.append(jnp.dot(_bf16(p), _bf16(vh),
                                 preferred_element_type=jnp.float32))
        att = jnp.concatenate(heads, axis=-1)          # (BT, C)
        sa = jnp.dot(_bf16(att), wp[l],                # ONE output projection
                     preferred_element_type=jnp.float32) + bp[l]
        x = x + sa                                     # residual 1

        # ---- LN2 + FeedForward ----------------------------------------------
        xn2 = _layer_norm(x, ln2w[l], ln2b[l])
        hdn = jnp.dot(_bf16(xn2), w1[l], preferred_element_type=jnp.float32) + b1[l]
        hdn = jnp.maximum(hdn, 0.0)                    # ReLU
        ff = jnp.dot(_bf16(hdn), w2[l], preferred_element_type=jnp.float32) + b2[l]
        x = x + ff                                     # residual 2

    # ---- final LayerNorm + lm_head (vocab padded to lane-dense width) -------
    xf = _layer_norm(x, lnfw[...], lnfb[...])
    o_ref[...] = jnp.dot(_bf16(xf), wlm[...],
                         preferred_element_type=jnp.float32) + blm[...]


def _full_spec(shape):
    n = len(shape)
    return pl.BlockSpec(shape, lambda i, _n=n: (0,) * _n)


def attention_model_forward(params, idx):
    """idx: (B, T) int32 token ids -> logits (B, T, vocab). targets=None -> loss=None."""
    B, T = idx.shape
    C = params["tok_emb"].shape[1]
    V = params["vocab_size"]
    Vp = params["wlm"].shape[1]
    L = params["ln1w"].shape[0]
    H = params["num_heads"]
    hs = C // H
    BT = B * T

    # Embedding lookups are gathers -> plain-JAX glue outside the kernel.
    tok = jnp.take(params["tok_emb"], idx, axis=0)           # (B, T, C)
    pos = params["pos_emb"][:T][None, :, :]                  # (1, T, C)
    x = (tok + pos).reshape(BT, C)

    # Block-diagonal causal mask bias (batch folded onto rows), host precomputed.
    r = np.arange(BT)
    allowed = ((r[:, None] // T) == (r[None, :] // T)) & \
              ((r[None, :] % T) <= (r[:, None] % T))
    bias = jnp.asarray(np.where(allowed, 0.0, -1e30), dtype=jnp.float32)

    weights = [params[k] for k in ("ln1w", "ln1b", "wqkv", "wp", "bp",
                                   "ln2w", "ln2b", "w1", "b1", "w2", "b2",
                                   "lnfw", "lnfb", "wlm", "blm")]
    inputs = [x, bias] + weights

    logits_padded = pl.pallas_call(
        functools.partial(_model_kernel, num_layers=L, num_heads=H, head_size=hs),
        out_shape=jax.ShapeDtypeStruct((BT, Vp), jnp.float32),
        grid_spec=pltpu.PrefetchScalarGridSpec(
            num_scalar_prefetch=0,
            grid=(1,),                                  # whole problem is one block
            in_specs=[_full_spec(a.shape) for a in inputs],
            out_specs=pl.BlockSpec((BT, Vp), lambda i: (0, 0)),
        ),
        compiler_params=pltpu.CompilerParams(
            dimension_semantics=("arbitrary",),
            vmem_limit_bytes=32 * 1024 * 1024,          # above v5e default, safe on all gens
        ),
    )(*inputs)

    return logits_padded.reshape(B, T, Vp)[:, :, :V]


def init_params(key, vocab_size, block_size, num_heads, head_size, n_layer):
    C = num_heads * head_size
    Vp = max(128, ((vocab_size + 127) // 128) * 128)    # lane-dense lm_head width

    def nrm(k, shape, dtype=jnp.bfloat16, std=0.02):
        return (std * jax.random.normal(k, shape, dtype=jnp.float32)).astype(dtype)

    keys = iter(jax.random.split(key, 16 + n_layer * 16))
    p = {
        "vocab_size": vocab_size,
        "num_heads": num_heads,
        "tok_emb": nrm(next(keys), (vocab_size, C), jnp.float32),
        "pos_emb": nrm(next(keys), (block_size, C), jnp.float32),
        "lnfw": jnp.ones((1, C), jnp.float32),
        "lnfb": jnp.zeros((1, C), jnp.float32),
    }
    # lm_head padded to Vp lanes; padding columns are zero and sliced off later.
    p["wlm"] = jnp.zeros((C, Vp), jnp.bfloat16).at[:, :vocab_size].set(
        nrm(next(keys), (C, vocab_size)))
    p["blm"] = jnp.zeros((1, Vp), jnp.float32).at[:, :vocab_size].set(
        nrm(next(keys), (1, vocab_size), jnp.float32))

    def stack(fn):
        return jnp.stack([fn(i) for i in range(n_layer)], axis=0)

    # Per-layer stacked weights: matmul operands in bf16, LN params / biases in f32.
    p["ln1w"] = jnp.ones((n_layer, 1, C), jnp.float32)
    p["ln1b"] = jnp.zeros((n_layer, 1, C), jnp.float32)
    p["ln2w"] = jnp.ones((n_layer, 1, C), jnp.float32)
    p["ln2b"] = jnp.zeros((n_layer, 1, C), jnp.float32)
    p["wqkv"] = stack(lambda i: nrm(next(keys), (C, 3 * C)))       # [Wq | Wk | Wv]
    p["wp"] = stack(lambda i: nrm(next(keys), (C, C)))
    p["bp"] = stack(lambda i: nrm(next(keys), (1, C), jnp.float32))
    p["w1"] = stack(lambda i: nrm(next(keys), (C, 4 * C)))
    p["b1"] = stack(lambda i: nrm(next(keys), (1, 4 * C), jnp.float32))
    p["w2"] = stack(lambda i: nrm(next(keys), (4 * C, C)))
    p["b2"] = stack(lambda i: nrm(next(keys), (1, C), jnp.float32))
    return p


if __name__ == "__main__":
    vocab_size, block_size = 64, 8
    num_heads, head_size, n_layer = 2, 16, 2   # n_embd = 32
    B, T = 2, 8

    key = jax.random.PRNGKey(0)
    pkey, ikey = jax.random.split(key)
    params = init_params(pkey, vocab_size, block_size, num_heads, head_size, n_layer)
    idx = jax.random.randint(ikey, (B, T), 0, vocab_size, dtype=jnp.int32)

    logits = attention_model_forward(params, idx)
    jax.block_until_ready(logits)
    assert logits.shape == (B, T, vocab_size)
    assert bool(jnp.all(jnp.isfinite(logits)))
    print("KERNEL_OK")
</pallas_src>

<mosaic_0001>
module attributes {stable_mosaic.version = 11 : i64} {
  func.func @_model_kernel(%arg0: i32, %arg1: memref<16x32xf32, #tpu.memory_space<vmem>>, %arg2: memref<16x16xf32, #tpu.memory_space<vmem>>, %arg3: memref<2x1x32xf32, #tpu.memory_space<vmem>>, %arg4: memref<2x1x32xf32, #tpu.memory_space<vmem>>, %arg5: memref<2x32x96xbf16, #tpu.memory_space<vmem>>, %arg6: memref<2x32x32xbf16, #tpu.memory_space<vmem>>, %arg7: memref<2x1x32xf32, #tpu.memory_space<vmem>>, %arg8: memref<2x1x32xf32, #tpu.memory_space<vmem>>, %arg9: memref<2x1x32xf32, #tpu.memory_space<vmem>>, %arg10: memref<2x32x128xbf16, #tpu.memory_space<vmem>>, %arg11: memref<2x1x128xf32, #tpu.memory_space<vmem>>, %arg12: memref<2x128x32xbf16, #tpu.memory_space<vmem>>, %arg13: memref<2x1x32xf32, #tpu.memory_space<vmem>>, %arg14: memref<1x32xf32, #tpu.memory_space<vmem>>, %arg15: memref<1x32xf32, #tpu.memory_space<vmem>>, %arg16: memref<32x128xbf16, #tpu.memory_space<vmem>>, %arg17: memref<1x128xf32, #tpu.memory_space<vmem>>, %arg18: memref<16x128xf32, #tpu.memory_space<vmem>>) attributes {dimension_semantics = [#tpu.dimension_semantics<arbitrary>], iteration_bounds = array<i64: 1>, scalar_prefetch = 0 : i64, scratch_operands = 0 : i64, tpu.core_type = #tpu.core_type<tc>, window_params = [{pipeline_mode = #tpu.pipeline_mode<synchronous>, transform_indices = @transform_0, window_bounds = array<i64: 16, 32>}, {pipeline_mode = #tpu.pipeline_mode<synchronous>, transform_indices = @transform_1, window_bounds = array<i64: 16, 16>}, {pipeline_mode = #tpu.pipeline_mode<synchronous>, transform_indices = @transform_2, window_bounds = array<i64: 2, 1, 32>}, {pipeline_mode = #tpu.pipeline_mode<synchronous>, transform_indices = @transform_3, window_bounds = array<i64: 2, 1, 32>}, {pipeline_mode = #tpu.pipeline_mode<synchronous>, transform_indices = @transform_4, window_bounds = array<i64: 2, 32, 96>}, {pipeline_mode = #tpu.pipeline_mode<synchronous>, transform_indices = @transform_5, window_bounds = array<i64: 2, 32, 32>}, {pipeline_mode = #tpu.pipeline_mode<synchronous>, transform_indices = @transform_6, window_bounds = array<i64: 2, 1, 32>}, {pipeline_mode = #tpu.pipeline_mode<synchronous>, transform_indices = @transform_7, window_bounds = array<i64: 2, 1, 32>}, {pipeline_mode = #tpu.pipeline_mode<synchronous>, transform_indices = @transform_8, window_bounds = array<i64: 2, 1, 32>}, {pipeline_mode = #tpu.pipeline_mode<synchronous>, transform_indices = @transform_9, window_bounds = array<i64: 2, 32, 128>}, {pipeline_mode = #tpu.pipeline_mode<synchronous>, transform_indices = @transform_10, window_bounds = array<i64: 2, 1, 128>}, {pipeline_mode = #tpu.pipeline_mode<synchronous>, transform_indices = @transform_11, window_bounds = array<i64: 2, 128, 32>}, {pipeline_mode = #tpu.pipeline_mode<synchronous>, transform_indices = @transform_12, window_bounds = array<i64: 2, 1, 32>}, {pipeline_mode = #tpu.pipeline_mode<synchronous>, transform_indices = @transform_13, window_bounds = array<i64: 1, 32>}, {pipeline_mode = #tpu.pipeline_mode<synchronous>, transform_indices = @transform_14, window_bounds = array<i64: 1, 32>}, {pipeline_mode = #tpu.pipeline_mode<synchronous>, transform_indices = @transform_15, window_bounds = array<i64: 32, 128>}, {pipeline_mode = #tpu.pipeline_mode<synchronous>, transform_indices = @transform_16, window_bounds = array<i64: 1, 128>}, {pipeline_mode = #tpu.pipeline_mode<synchronous>, transform_indices = @transform_17, window_bounds = array<i64: 16, 128>}]} {
    %c0 = arith.constant 0 : index
    %c0_0 = arith.constant 0 : index
    %0 = vector.load %arg2[%c0, %c0_0] : memref<16x16xf32, #tpu.memory_space<vmem>>, vector<16x16xf32>
    %c0_1 = arith.constant 0 : index
    %c0_2 = arith.constant 0 : index
    %1 = vector.load %arg1[%c0_1, %c0_2] : memref<16x32xf32, #tpu.memory_space<vmem>>, vector<16x32xf32>
    %c0_3 = arith.constant 0 : index
    %c0_4 = arith.constant 0 : index
    %c0_5 = arith.constant 0 : index
    %2 = vector.load %arg3[%c0_3, %c0_4, %c0_5] : memref<2x1x32xf32, #tpu.memory_space<vmem>>, vector<1x1x32xf32>
    %3 = vector.shape_cast %2 : vector<1x1x32xf32> to vector<1x32xf32>
    %c0_6 = arith.constant 0 : index
    %c0_7 = arith.constant 0 : index
    %c0_8 = arith.constant 0 : index
    %4 = vector.load %arg4[%c0_6, %c0_7, %c0_8] : memref<2x1x32xf32, #tpu.memory_space<vmem>>, vector<1x1x32xf32>
    %5 = vector.shape_cast %4 : vector<1x1x32xf32> to vector<1x32xf32>
    %cst = arith.constant dense<0.000000e+00> : vector<16xf32>
    %6 = vector.multi_reduction <add>, %1, %cst [1] : vector<16x32xf32> to vector<16xf32>
    %7 = vector.shape_cast %6 : vector<16xf32> to vector<16x1xf32>
    %cst_9 = arith.constant 3.200000e+01 : f32
    %8 = vector.broadcast %cst_9 : f32 to vector<16x1xf32>
    %9 = arith.divf %7, %8 : vector<16x1xf32>
    %10 = vector.broadcast %9 : vector<16x1xf32> to vector<16x32xf32>
    %11 = arith.subf %1, %10 : vector<16x32xf32>
    %12 = arith.mulf %11, %11 : vector<16x32xf32>
    %cst_10 = arith.constant dense<0.000000e+00> : vector<16xf32>
    %13 = vector.multi_reduction <add>, %12, %cst_10 [1] : vector<16x32xf32> to vector<16xf32>
    %14 = vector.shape_cast %13 : vector<16xf32> to vector<16x1xf32>
    %cst_11 = arith.constant 3.200000e+01 : f32
    %15 = vector.broadcast %cst_11 : f32 to vector<16x1xf32>
    %16 = arith.divf %14, %15 : vector<16x1xf32>
    %17 = vector.broadcast %9 : vector<16x1xf32> to vector<16x32xf32>
    %18 = arith.subf %1, %17 : vector<16x32xf32>
    %cst_12 = arith.constant 9.99999974E-6 : f32
    %19 = vector.broadcast %cst_12 : f32 to vector<16x1xf32>
    %20 = arith.addf %16, %19 : vector<16x1xf32>
    %21 = math.rsqrt %20 : vector<16x1xf32>
    %22 = vector.broadcast %21 : vector<16x1xf32> to vector<16x32xf32>
    %23 = arith.mulf %18, %22 : vector<16x32xf32>
    %24 = vector.broadcast %3 : vector<1x32xf32> to vector<16x32xf32>
    %25 = arith.mulf %23, %24 : vector<16x32xf32>
    %26 = vector.broadcast %5 : vector<1x32xf32> to vector<16x32xf32>
    %27 = arith.addf %25, %26 : vector<16x32xf32>
    %28 = arith.truncf %27 : vector<16x32xf32> to vector<16x32xbf16>
    %c0_13 = arith.constant 0 : index
    %c0_14 = arith.constant 0 : index
    %c0_15 = arith.constant 0 : index
    %29 = vector.load %arg5[%c0_13, %c0_14, %c0_15] : memref<2x32x96xbf16, #tpu.memory_space<vmem>>, vector<1x32x96xbf16>
    %30 = vector.shape_cast %29 : vector<1x32x96xbf16> to vector<32x96xbf16>
    %cst_16 = arith.constant dense<0.000000e+00> : vector<16x96xf32>
    %31 = tpu.matmul %28, %30, %cst_16 {dimension_numbers = #tpu.dot_dimension_numbers<[1], [0], [0], [1], [0, 0, 1, 1], [], []>} : vector<16x32xbf16>, vector<32x96xbf16>, vector<16x96xf32> -> vector<16x96xf32>
    %32 = vector.extract_strided_slice %31 {offsets = [0, 0], sizes = [16, 16], strides = [1, 1]} : vector<16x96xf32> to vector<16x16xf32>
    %33 = vector.extract_strided_slice %31 {offsets = [0, 32], sizes = [16, 16], strides = [1, 1]} : vector<16x96xf32> to vector<16x16xf32>
    %34 = vector.extract_strided_slice %31 {offsets = [0, 64], sizes = [16, 16], strides = [1, 1]} : vector<16x96xf32> to vector<16x16xf32>
    %35 = arith.truncf %32 : vector<16x16xf32> to vector<16x16xbf16>
    %36 = arith.truncf %33 : vector<16x16xf32> to vector<16x16xbf16>
    %cst_17 = arith.constant dense<0.000000e+00> : vector<16x16xf32>
    %37 = tpu.matmul %35, %36, %cst_17 {dimension_numbers = #tpu.dot_dimension_numbers<[1], [1], [0], [0], [0, 0, 1, 0], [], []>} : vector<16x16xbf16>, vector<16x16xbf16>, vector<16x16xf32> -> vector<16x16xf32>
    %cst_18 = arith.constant 0.176776692 : f32
    %38 = vector.broadcast %cst_18 : f32 to vector<16x16xf32>
    %39 = arith.mulf %37, %38 : vector<16x16xf32>
    %40 = arith.addf %39, %0 : vector<16x16xf32>
    %cst_19 = arith.constant dense<0xFF800000> : vector<16xf32>
    %41 = vector.multi_reduction <maximumf>, %40, %cst_19 [1] : vector<16x16xf32> to vector<16xf32>
    %42 = vector.shape_cast %41 : vector<16xf32> to vector<16x1xf32>
    %43 = vector.broadcast %42 : vector<16x1xf32> to vector<16x16xf32>
    %44 = arith.subf %40, %43 : vector<16x16xf32>
    %45 = math.exp %44 : vector<16x16xf32>
    %cst_20 = arith.constant dense<0.000000e+00> : vector<16xf32>
    %46 = vector.multi_reduction <add>, %45, %cst_20 [1] : vector<16x16xf32> to vector<16xf32>
    %47 = vector.shape_cast %46 : vector<16xf32> to vector<16x1xf32>
    %48 = tpu.reciprocal %47 {approx = true} : vector<16x1xf32> -> vector<16x1xf32>
    %49 = vector.broadcast %48 : vector<16x1xf32> to vector<16x16xf32>
    %50 = arith.mulf %45, %49 : vector<16x16xf32>
    %51 = arith.truncf %50 : vector<16x16xf32> to vector<16x16xbf16>
    %52 = arith.truncf %34 : vector<16x16xf32> to vector<16x16xbf16>
    %cst_21 = arith.constant dense<0.000000e+00> : vector<16x16xf32>
    %53 = tpu.matmul %51, %52, %cst_21 {dimension_numbers = #tpu.dot_dimension_numbers<[1], [0], [0], [1], [0, 0, 1, 1], [], []>} : vector<16x16xbf16>, vector<16x16xbf16>, vector<16x16xf32> -> vector<16x16xf32>
    %54 = vector.extract_strided_slice %31 {offsets = [0, 16], sizes = [16, 16], strides = [1, 1]} : vector<16x96xf32> to vector<16x16xf32>
    %55 = vector.extract_strided_slice %31 {offsets = [0, 48], sizes = [16, 16], strides = [1, 1]} : vector<16x96xf32> to vector<16x16xf32>
    %56 = vector.extract_strided_slice %31 {offsets = [0, 80], sizes = [16, 16], strides = [1, 1]} : vector<16x96xf32> to vector<16x16xf32>
    %57 = arith.truncf %54 : vector<16x16xf32> to vector<16x16xbf16>
    %58 = arith.truncf %55 : vector<16x16xf32> to vector<16x16xbf16>
    %cst_22 = arith.constant dense<0.000000e+00> : vector<16x16xf32>
    %59 = tpu.matmul %57, %58, %cst_22 {dimension_numbers = #tpu.dot_dimension_numbers<[1], [1], [0], [0], [0, 0, 1, 0], [], []>} : vector<16x16xbf16>, vector<16x16xbf16>, vector<16x16xf32> -> vector<16x16xf32>
    %cst_23 = arith.constant 0.176776692 : f32
    %60 = vector.broadcast %cst_23 : f32 to vector<16x16xf32>
    %61 = arith.mulf %59, %60 : vector<16x16xf32>
    %62 = arith.addf %61, %0 : vector<16x16xf32>
    %cst_24 = arith.constant dense<0xFF800000> : vector<16xf32>
    %63 = vector.multi_reduction <maximumf>, %62, %cst_24 [1] : vector<16x16xf32> to vector<16xf32>
    %64 = vector.shape_cast %63 : vector<16xf32> to vector<16x1xf32>
    %65 = vector.broadcast %64 : vector<16x1xf32> to vector<16x16xf32>
    %66 = arith.subf %62, %65 : vector<16x16xf32>
    %67 = math.exp %66 : vector<16x16xf32>
    %cst_25 = arith.constant dense<0.000000e+00> : vector<16xf32>
    %68 = vector.multi_reduction <add>, %67, %cst_25 [1] : vector<16x16xf32> to vector<16xf32>
    %69 = vector.shape_cast %68 : vector<16xf32> to vector<16x1xf32>
    %70 = tpu.reciprocal %69 {approx = true} : vector<16x1xf32> -> vector<16x1xf32>
    %71 = vector.broadcast %70 : vector<16x1xf32> to vector<16x16xf32>
    %72 = arith.mulf %67, %71 : vector<16x16xf32>
    %73 = arith.truncf %72 : vector<16x16xf32> to vector<16x16xbf16>
    %74 = arith.truncf %56 : vector<16x16xf32> to vector<16x16xbf16>
    %cst_26 = arith.constant dense<0.000000e+00> : vector<16x16xf32>
    %75 = tpu.matmul %73, %74, %cst_26 {dimension_numbers = #tpu.dot_dimension_numbers<[1], [0], [0], [1], [0, 0, 1, 1], [], []>} : vector<16x16xbf16>, vector<16x16xbf16>, vector<16x16xf32> -> vector<16x16xf32>
    %76 = tpu.concatenate %53, %75 in 1 : vector<16x16xf32>, vector<16x16xf32> -> vector<16x32xf32>
    %77 = arith.truncf %76 : vector<16x32xf32> to vector<16x32xbf16>
    %c0_27 = arith.constant 0 : index
    %c0_28 = arith.constant 0 : index
    %c0_29 = arith.constant 0 : index
    %78 = vector.load %arg6[%c0_27, %c0_28, %c0_29] : memref<2x32x32xbf16, #tpu.memory_space<vmem>>, vector<1x32x32xbf16>
    %79 = vector.shape_cast %78 : vector<1x32x32xbf16> to vector<32x32xbf16>
    %cst_30 = arith.constant dense<0.000000e+00> : vector<16x32xf32>
    %80 = tpu.matmul %77, %79, %cst_30 {dimension_numbers = #tpu.dot_dimension_numbers<[1], [0], [0], [1], [0, 0, 1, 1], [], []>} : vector<16x32xbf16>, vector<32x32xbf16>, vector<16x32xf32> -> vector<16x32xf32>
    %c0_31 = arith.constant 0 : index
    %c0_32 = arith.constant 0 : index
    %c0_33 = arith.constant 0 : index
    %81 = vector.load %arg7[%c0_31, %c0_32, %c0_33] : memref<2x1x32xf32, #tpu.memory_space<vmem>>, vector<1x1x32xf32>
    %82 = vector.shape_cast %81 : vector<1x1x32xf32> to vector<1x32xf32>
    %83 = vector.broadcast %82 : vector<1x32xf32> to vector<16x32xf32>
    %84 = arith.addf %80, %83 : vector<16x32xf32>
    %85 = arith.addf %1, %84 : vector<16x32xf32>
    %c0_34 = arith.constant 0 : index
    %c0_35 = arith.constant 0 : index
    %c0_36 = arith.constant 0 : index
    %86 = vector.load %arg8[%c0_34, %c0_35, %c0_36] : memref<2x1x32xf32, #tpu.memory_space<vmem>>, vector<1x1x32xf32>
    %87 = vector.shape_cast %86 : vector<1x1x32xf32> to vector<1x32xf32>
    %c0_37 = arith.constant 0 : index
    %c0_38 = arith.constant 0 : index
    %c0_39 = arith.constant 0 : index
    %88 = vector.load %arg9[%c0_37, %c0_38, %c0_39] : memref<2x1x32xf32, #tpu.memory_space<vmem>>, vector<1x1x32xf32>
    %89 = vector.shape_cast %88 : vector<1x1x32xf32> to vector<1x32xf32>
    %cst_40 = arith.constant dense<0.000000e+00> : vector<16xf32>
    %90 = vector.multi_reduction <add>, %85, %cst_40 [1] : vector<16x32xf32> to vector<16xf32>
    %91 = vector.shape_cast %90 : vector<16xf32> to vector<16x1xf32>
    %cst_41 = arith.constant 3.200000e+01 : f32
    %92 = vector.broadcast %cst_41 : f32 to vector<16x1xf32>
    %93 = arith.divf %91, %92 : vector<16x1xf32>
    %94 = vector.broadcast %93 : vector<16x1xf32> to vector<16x32xf32>
    %95 = arith.subf %85, %94 : vector<16x32xf32>
    %96 = arith.mulf %95, %95 : vector<16x32xf32>
    %cst_42 = arith.constant dense<0.000000e+00> : vector<16xf32>
    %97 = vector.multi_reduction <add>, %96, %cst_42 [1] : vector<16x32xf32> to vector<16xf32>
    %98 = vector.shape_cast %97 : vector<16xf32> to vector<16x1xf32>
    %cst_43 = arith.constant 3.200000e+01 : f32
    %99 = vector.broadcast %cst_43 : f32 to vector<16x1xf32>
    %100 = arith.divf %98, %99 : vector<16x1xf32>
    %101 = vector.broadcast %93 : vector<16x1xf32> to vector<16x32xf32>
    %102 = arith.subf %85, %101 : vector<16x32xf32>
    %cst_44 = arith.constant 9.99999974E-6 : f32
    %103 = vector.broadcast %cst_44 : f32 to vector<16x1xf32>
    %104 = arith.addf %100, %103 : vector<16x1xf32>
    %105 = math.rsqrt %104 : vector<16x1xf32>
    %106 = vector.broadcast %105 : vector<16x1xf32> to vector<16x32xf32>
    %107 = arith.mulf %102, %106 : vector<16x32xf32>
    %108 = vector.broadcast %87 : vector<1x32xf32> to vector<16x32xf32>
    %109 = arith.mulf %107, %108 : vector<16x32xf32>
    %110 = vector.broadcast %89 : vector<1x32xf32> to vector<16x32xf32>
    %111 = arith.addf %109, %110 : vector<16x32xf32>
    %112 = arith.truncf %111 : vector<16x32xf32> to vector<16x32xbf16>
    %c0_45 = arith.constant 0 : index
    %c0_46 = arith.constant 0 : index
    %c0_47 = arith.constant 0 : index
    %113 = vector.load %arg10[%c0_45, %c0_46, %c0_47] : memref<2x32x128xbf16, #tpu.memory_space<vmem>>, vector<1x32x128xbf16>
    %114 = vector.shape_cast %113 : vector<1x32x128xbf16> to vector<32x128xbf16>
    %cst_48 = arith.constant dense<0.000000e+00> : vector<16x128xf32>
    %115 = tpu.matmul %112, %114, %cst_48 {dimension_numbers = #tpu.dot_dimension_numbers<[1], [0], [0], [1], [0, 0, 1, 1], [], []>} : vector<16x32xbf16>, vector<32x128xbf16>, vector<16x128xf32> -> vector<16x128xf32>
    %c0_49 = arith.constant 0 : index
    %c0_50 = arith.constant 0 : index
    %c0_51 = arith.constant 0 : index
    %116 = vector.load %arg11[%c0_49, %c0_50, %c0_51] : memref<2x1x128xf32, #tpu.memory_space<vmem>>, vector<1x1x128xf32>
    %117 = vector.shape_cast %116 : vector<1x1x128xf32> to vector<1x128xf32>
    %118 = vector.broadcast %117 : vector<1x128xf32> to vector<16x128xf32>
    %119 = arith.addf %115, %118 : vector<16x128xf32>
    %cst_52 = arith.constant 0.000000e+00 : f32
    %120 = vector.broadcast %cst_52 : f32 to vector<16x128xf32>
    %121 = arith.maximumf %119, %120 : vector<16x128xf32>
    %122 = arith.truncf %121 : vector<16x128xf32> to vector<16x128xbf16>
    %c0_53 = arith.constant 0 : index
    %c0_54 = arith.constant 0 : index
    %c0_55 = arith.constant 0 : index
    %123 = vector.load %arg12[%c0_53, %c0_54, %c0_55] : memref<2x128x32xbf16, #tpu.memory_space<vmem>>, vector<1x128x32xbf16>
    %124 = vector.shape_cast %123 : vector<1x128x32xbf16> to vector<128x32xbf16>
    %cst_56 = arith.constant dense<0.000000e+00> : vector<16x32xf32>
    %125 = tpu.matmul %122, %124, %cst_56 {dimension_numbers = #tpu.dot_dimension_numbers<[1], [0], [0], [1], [0, 0, 1, 1], [], []>} : vector<16x128xbf16>, vector<128x32xbf16>, vector<16x32xf32> -> vector<16x32xf32>
    %c0_57 = arith.constant 0 : index
    %c0_58 = arith.constant 0 : index
    %c0_59 = arith.constant 0 : index
    %126 = vector.load %arg13[%c0_57, %c0_58, %c0_59] : memref<2x1x32xf32, #tpu.memory_space<vmem>>, vector<1x1x32xf32>
    %127 = vector.shape_cast %126 : vector<1x1x32xf32> to vector<1x32xf32>
    %128 = vector.broadcast %127 : vector<1x32xf32> to vector<16x32xf32>
    %129 = arith.addf %125, %128 : vector<16x32xf32>
    %130 = arith.addf %85, %129 : vector<16x32xf32>
    %c1 = arith.constant 1 : index
    %c0_60 = arith.constant 0 : index
    %c0_61 = arith.constant 0 : index
    %131 = vector.load %arg3[%c1, %c0_60, %c0_61] : memref<2x1x32xf32, #tpu.memory_space<vmem>>, vector<1x1x32xf32>
    %132 = vector.shape_cast %131 : vector<1x1x32xf32> to vector<1x32xf32>
    %c1_62 = arith.constant 1 : index
    %c0_63 = arith.constant 0 : index
    %c0_64 = arith.constant 0 : index
    %133 = vector.load %arg4[%c1_62, %c0_63, %c0_64] : memref<2x1x32xf32, #tpu.memory_space<vmem>>, vector<1x1x32xf32>
    %134 = vector.shape_cast %133 : vector<1x1x32xf32> to vector<1x32xf32>
    %cst_65 = arith.constant dense<0.000000e+00> : vector<16xf32>
    %135 = vector.multi_reduction <add>, %130, %cst_65 [1] : vector<16x32xf32> to vector<16xf32>
    %136 = vector.shape_cast %135 : vector<16xf32> to vector<16x1xf32>
    %cst_66 = arith.constant 3.200000e+01 : f32
    %137 = vector.broadcast %cst_66 : f32 to vector<16x1xf32>
    %138 = arith.divf %136, %137 : vector<16x1xf32>
    %139 = vector.broadcast %138 : vector<16x1xf32> to vector<16x32xf32>
    %140 = arith.subf %130, %139 : vector<16x32xf32>
    %141 = arith.mulf %140, %140 : vector<16x32xf32>
    %cst_67 = arith.constant dense<0.000000e+00> : vector<16xf32>
    %142 = vector.multi_reduction <add>, %141, %cst_67 [1] : vector<16x32xf32> to vector<16xf32>
    %143 = vector.shape_cast %142 : vector<16xf32> to vector<16x1xf32>
    %cst_68 = arith.constant 3.200000e+01 : f32
    %144 = vector.broadcast %cst_68 : f32 to vector<16x1xf32>
    %145 = arith.divf %143, %144 : vector<16x1xf32>
    %146 = vector.broadcast %138 : vector<16x1xf32> to vector<16x32xf32>
    %147 = arith.subf %130, %146 : vector<16x32xf32>
    %cst_69 = arith.constant 9.99999974E-6 : f32
    %148 = vector.broadcast %cst_69 : f32 to vector<16x1xf32>
    %149 = arith.addf %145, %148 : vector<16x1xf32>
    %150 = math.rsqrt %149 : vector<16x1xf32>
    %151 = vector.broadcast %150 : vector<16x1xf32> to vector<16x32xf32>
    %152 = arith.mulf %147, %151 : vector<16x32xf32>
    %153 = vector.broadcast %132 : vector<1x32xf32> to vector<16x32xf32>
    %154 = arith.mulf %152, %153 : vector<16x32xf32>
    %155 = vector.broadcast %134 : vector<1x32xf32> to vector<16x32xf32>
    %156 = arith.addf %154, %155 : vector<16x32xf32>
    %157 = arith.truncf %156 : vector<16x32xf32> to vector<16x32xbf16>
    %c1_70 = arith.constant 1 : index
    %c0_71 = arith.constant 0 : index
    %c0_72 = arith.constant 0 : index
    %158 = vector.load %arg5[%c1_70, %c0_71, %c0_72] : memref<2x32x96xbf16, #tpu.memory_space<vmem>>, vector<1x32x96xbf16>
    %159 = vector.shape_cast %158 : vector<1x32x96xbf16> to vector<32x96xbf16>
    %cst_73 = arith.constant dense<0.000000e+00> : vector<16x96xf32>
    %160 = tpu.matmul %157, %159, %cst_73 {dimension_numbers = #tpu.dot_dimension_numbers<[1], [0], [0], [1], [0, 0, 1, 1], [], []>} : vector<16x32xbf16>, vector<32x96xbf16>, vector<16x96xf32> -> vector<16x96xf32>
    %161 = vector.extract_strided_slice %160 {offsets = [0, 0], sizes = [16, 16], strides = [1, 1]} : vector<16x96xf32> to vector<16x16xf32>
    %162 = vector.extract_strided_slice %160 {offsets = [0, 32], sizes = [16, 16], strides = [1, 1]} : vector<16x96xf32> to vector<16x16xf32>
    %163 = vector.extract_strided_slice %160 {offsets = [0, 64], sizes = [16, 16], strides = [1, 1]} : vector<16x96xf32> to vector<16x16xf32>
    %164 = arith.truncf %161 : vector<16x16xf32> to vector<16x16xbf16>
    %165 = arith.truncf %162 : vector<16x16xf32> to vector<16x16xbf16>
    %cst_74 = arith.constant dense<0.000000e+00> : vector<16x16xf32>
    %166 = tpu.matmul %164, %165, %cst_74 {dimension_numbers = #tpu.dot_dimension_numbers<[1], [1], [0], [0], [0, 0, 1, 0], [], []>} : vector<16x16xbf16>, vector<16x16xbf16>, vector<16x16xf32> -> vector<16x16xf32>
    %cst_75 = arith.constant 0.176776692 : f32
    %167 = vector.broadcast %cst_75 : f32 to vector<16x16xf32>
    %168 = arith.mulf %166, %167 : vector<16x16xf32>
    %169 = arith.addf %168, %0 : vector<16x16xf32>
    %cst_76 = arith.constant dense<0xFF800000> : vector<16xf32>
    %170 = vector.multi_reduction <maximumf>, %169, %cst_76 [1] : vector<16x16xf32> to vector<16xf32>
    %171 = vector.shape_cast %170 : vector<16xf32> to vector<16x1xf32>
    %172 = vector.broadcast %171 : vector<16x1xf32> to vector<16x16xf32>
    %173 = arith.subf %169, %172 : vector<16x16xf32>
    %174 = math.exp %173 : vector<16x16xf32>
    %cst_77 = arith.constant dense<0.000000e+00> : vector<16xf32>
    %175 = vector.multi_reduction <add>, %174, %cst_77 [1] : vector<16x16xf32> to vector<16xf32>
    %176 = vector.shape_cast %175 : vector<16xf32> to vector<16x1xf32>
    %177 = tpu.reciprocal %176 {approx = true} : vector<16x1xf32> -> vector<16x1xf32>
    %178 = vector.broadcast %177 : vector<16x1xf32> to vector<16x16xf32>
    %179 = arith.mulf %174, %178 : vector<16x16xf32>
    %180 = arith.truncf %179 : vector<16x16xf32> to vector<16x16xbf16>
    %181 = arith.truncf %163 : vector<16x16xf32> to vector<16x16xbf16>
    %cst_78 = arith.constant dense<0.000000e+00> : vector<16x16xf32>
    %182 = tpu.matmul %180, %181, %cst_78 {dimension_numbers = #tpu.dot_dimension_numbers<[1], [0], [0], [1], [0, 0, 1, 1], [], []>} : vector<16x16xbf16>, vector<16x16xbf16>, vector<16x16xf32> -> vector<16x16xf32>
    %183 = vector.extract_strided_slice %160 {offsets = [0, 16], sizes = [16, 16], strides = [1, 1]} : vector<16x96xf32> to vector<16x16xf32>
    %184 = vector.extract_strided_slice %160 {offsets = [0, 48], sizes = [16, 16], strides = [1, 1]} : vector<16x96xf32> to vector<16x16xf32>
    %185 = vector.extract_strided_slice %160 {offsets = [0, 80], sizes = [16, 16], strides = [1, 1]} : vector<16x96xf32> to vector<16x16xf32>
    %186 = arith.truncf %183 : vector<16x16xf32> to vector<16x16xbf16>
    %187 = arith.truncf %184 : vector<16x16xf32> to vector<16x16xbf16>
    %cst_79 = arith.constant dense<0.000000e+00> : vector<16x16xf32>
    %188 = tpu.matmul %186, %187, %cst_79 {dimension_numbers = #tpu.dot_dimension_numbers<[1], [1], [0], [0], [0, 0, 1, 0], [], []>} : vector<16x16xbf16>, vector<16x16xbf16>, vector<16x16xf32> -> vector<16x16xf32>
    %cst_80 = arith.constant 0.176776692 : f32
    %189 = vector.broadcast %cst_80 : f32 to vector<16x16xf32>
    %190 = arith.mulf %188, %189 : vector<16x16xf32>
    %191 = arith.addf %190, %0 : vector<16x16xf32>
    %cst_81 = arith.constant dense<0xFF800000> : vector<16xf32>
    %192 = vector.multi_reduction <maximumf>, %191, %cst_81 [1] : vector<16x16xf32> to vector<16xf32>
    %193 = vector.shape_cast %192 : vector<16xf32> to vector<16x1xf32>
    %194 = vector.broadcast %193 : vector<16x1xf32> to vector<16x16xf32>
    %195 = arith.subf %191, %194 : vector<16x16xf32>
    %196 = math.exp %195 : vector<16x16xf32>
    %cst_82 = arith.constant dense<0.000000e+00> : vector<16xf32>
    %197 = vector.multi_reduction <add>, %196, %cst_82 [1] : vector<16x16xf32> to vector<16xf32>
    %198 = vector.shape_cast %197 : vector<16xf32> to vector<16x1xf32>
    %199 = tpu.reciprocal %198 {approx = true} : vector<16x1xf32> -> vector<16x1xf32>
    %200 = vector.broadcast %199 : vector<16x1xf32> to vector<16x16xf32>
    %201 = arith.mulf %196, %200 : vector<16x16xf32>
    %202 = arith.truncf %201 : vector<16x16xf32> to vector<16x16xbf16>
    %203 = arith.truncf %185 : vector<16x16xf32> to vector<16x16xbf16>
    %cst_83 = arith.constant dense<0.000000e+00> : vector<16x16xf32>
    %204 = tpu.matmul %202, %203, %cst_83 {dimension_numbers = #tpu.dot_dimension_numbers<[1], [0], [0], [1], [0, 0, 1, 1], [], []>} : vector<16x16xbf16>, vector<16x16xbf16>, vector<16x16xf32> -> vector<16x16xf32>
    %205 = tpu.concatenate %182, %204 in 1 : vector<16x16xf32>, vector<16x16xf32> -> vector<16x32xf32>
    %206 = arith.truncf %205 : vector<16x32xf32> to vector<16x32xbf16>
    %c1_84 = arith.constant 1 : index
    %c0_85 = arith.constant 0 : index
    %c0_86 = arith.constant 0 : index
    %207 = vector.load %arg6[%c1_84, %c0_85, %c0_86] : memref<2x32x32xbf16, #tpu.memory_space<vmem>>, vector<1x32x32xbf16>
    %208 = vector.shape_cast %207 : vector<1x32x32xbf16> to vector<32x32xbf16>
    %cst_87 = arith.constant dense<0.000000e+00> : vector<16x32xf32>
    %209 = tpu.matmul %206, %208, %cst_87 {dimension_numbers = #tpu.dot_dimension_numbers<[1], [0], [0], [1], [0, 0, 1, 1], [], []>} : vector<16x32xbf16>, vector<32x32xbf16>, vector<16x32xf32> -> vector<16x32xf32>
    %c1_88 = arith.constant 1 : index
    %c0_89 = arith.constant 0 : index
    %c0_90 = arith.constant 0 : index
    %210 = vector.load %arg7[%c1_88, %c0_89, %c0_90] : memref<2x1x32xf32, #tpu.memory_space<vmem>>, vector<1x1x32xf32>
    %211 = vector.shape_cast %210 : vector<1x1x32xf32> to vector<1x32xf32>
    %212 = vector.broadcast %211 : vector<1x32xf32> to vector<16x32xf32>
    %213 = arith.addf %209, %212 : vector<16x32xf32>
    %214 = arith.addf %130, %213 : vector<16x32xf32>
    %c1_91 = arith.constant 1 : index
    %c0_92 = arith.constant 0 : index
    %c0_93 = arith.constant 0 : index
    %215 = vector.load %arg8[%c1_91, %c0_92, %c0_93] : memref<2x1x32xf32, #tpu.memory_space<vmem>>, vector<1x1x32xf32>
    %216 = vector.shape_cast %215 : vector<1x1x32xf32> to vector<1x32xf32>
    %c1_94 = arith.constant 1 : index
    %c0_95 = arith.constant 0 : index
    %c0_96 = arith.constant 0 : index
    %217 = vector.load %arg9[%c1_94, %c0_95, %c0_96] : memref<2x1x32xf32, #tpu.memory_space<vmem>>, vector<1x1x32xf32>
    %218 = vector.shape_cast %217 : vector<1x1x32xf32> to vector<1x32xf32>
    %cst_97 = arith.constant dense<0.000000e+00> : vector<16xf32>
    %219 = vector.multi_reduction <add>, %214, %cst_97 [1] : vector<16x32xf32> to vector<16xf32>
    %220 = vector.shape_cast %219 : vector<16xf32> to vector<16x1xf32>
    %cst_98 = arith.constant 3.200000e+01 : f32
    %221 = vector.broadcast %cst_98 : f32 to vector<16x1xf32>
    %222 = arith.divf %220, %221 : vector<16x1xf32>
    %223 = vector.broadcast %222 : vector<16x1xf32> to vector<16x32xf32>
    %224 = arith.subf %214, %223 : vector<16x32xf32>
    %225 = arith.mulf %224, %224 : vector<16x32xf32>
    %cst_99 = arith.constant dense<0.000000e+00> : vector<16xf32>
    %226 = vector.multi_reduction <add>, %225, %cst_99 [1] : vector<16x32xf32> to vector<16xf32>
    %227 = vector.shape_cast %226 : vector<16xf32> to vector<16x1xf32>
    %cst_100 = arith.constant 3.200000e+01 : f32
    %228 = vector.broadcast %cst_100 : f32 to vector<16x1xf32>
    %229 = arith.divf %227, %228 : vector<16x1xf32>
    %230 = vector.broadcast %222 : vector<16x1xf32> to vector<16x32xf32>
    %231 = arith.subf %214, %230 : vector<16x32xf32>
    %cst_101 = arith.constant 9.99999974E-6 : f32
    %232 = vector.broadcast %cst_101 : f32 to vector<16x1xf32>
    %233 = arith.addf %229, %232 : vector<16x1xf32>
    %234 = math.rsqrt %233 : vector<16x1xf32>
    %235 = vector.broadcast %234 : vector<16x1xf32> to vector<16x32xf32>
    %236 = arith.mulf %231, %235 : vector<16x32xf32>
    %237 = vector.broadcast %216 : vector<1x32xf32> to vector<16x32xf32>
    %238 = arith.mulf %236, %237 : vector<16x32xf32>
    %239 = vector.broadcast %218 : vector<1x32xf32> to vector<16x32xf32>
    %240 = arith.addf %238, %239 : vector<16x32xf32>
    %241 = arith.truncf %240 : vector<16x32xf32> to vector<16x32xbf16>
    %c1_102 = arith.constant 1 : index
    %c0_103 = arith.constant 0 : index
    %c0_104 = arith.constant 0 : index
    %242 = vector.load %arg10[%c1_102, %c0_103, %c0_104] : memref<2x32x128xbf16, #tpu.memory_space<vmem>>, vector<1x32x128xbf16>
    %243 = vector.shape_cast %242 : vector<1x32x128xbf16> to vector<32x128xbf16>
    %cst_105 = arith.constant dense<0.000000e+00> : vector<16x128xf32>
    %244 = tpu.matmul %241, %243, %cst_105 {dimension_numbers = #tpu.dot_dimension_numbers<[1], [0], [0], [1], [0, 0, 1, 1], [], []>} : vector<16x32xbf16>, vector<32x128xbf16>, vector<16x128xf32> -> vector<16x128xf32>
    %c1_106 = arith.constant 1 : index
    %c0_107 = arith.constant 0 : index
    %c0_108 = arith.constant 0 : index
    %245 = vector.load %arg11[%c1_106, %c0_107, %c0_108] : memref<2x1x128xf32, #tpu.memory_space<vmem>>, vector<1x1x128xf32>
    %246 = vector.shape_cast %245 : vector<1x1x128xf32> to vector<1x128xf32>
    %247 = vector.broadcast %246 : vector<1x128xf32> to vector<16x128xf32>
    %248 = arith.addf %244, %247 : vector<16x128xf32>
    %cst_109 = arith.constant 0.000000e+00 : f32
    %249 = vector.broadcast %cst_109 : f32 to vector<16x128xf32>
    %250 = arith.maximumf %248, %249 : vector<16x128xf32>
    %251 = arith.truncf %250 : vector<16x128xf32> to vector<16x128xbf16>
    %c1_110 = arith.constant 1 : index
    %c0_111 = arith.constant 0 : index
    %c0_112 = arith.constant 0 : index
    %252 = vector.load %arg12[%c1_110, %c0_111, %c0_112] : memref<2x128x32xbf16, #tpu.memory_space<vmem>>, vector<1x128x32xbf16>
    %253 = vector.shape_cast %252 : vector<1x128x32xbf16> to vector<128x32xbf16>
    %cst_113 = arith.constant dense<0.000000e+00> : vector<16x32xf32>
    %254 = tpu.matmul %251, %253, %cst_113 {dimension_numbers = #tpu.dot_dimension_numbers<[1], [0], [0], [1], [0, 0, 1, 1], [], []>} : vector<16x128xbf16>, vector<128x32xbf16>, vector<16x32xf32> -> vector<16x32xf32>
    %c1_114 = arith.constant 1 : index
    %c0_115 = arith.constant 0 : index
    %c0_116 = arith.constant 0 : index
    %255 = vector.load %arg13[%c1_114, %c0_115, %c0_116] : memref<2x1x32xf32, #tpu.memory_space<vmem>>, vector<1x1x32xf32>
    %256 = vector.shape_cast %255 : vector<1x1x32xf32> to vector<1x32xf32>
    %257 = vector.broadcast %256 : vector<1x32xf32> to vector<16x32xf32>
    %258 = arith.addf %254, %257 : vector<16x32xf32>
    %259 = arith.addf %214, %258 : vector<16x32xf32>
    %c0_117 = arith.constant 0 : index
    %c0_118 = arith.constant 0 : index
    %260 = vector.load %arg14[%c0_117, %c0_118] : memref<1x32xf32, #tpu.memory_space<vmem>>, vector<1x32xf32>
    %c0_119 = arith.constant 0 : index
    %c0_120 = arith.constant 0 : index
    %261 = vector.load %arg15[%c0_119, %c0_120] : memref<1x32xf32, #tpu.memory_space<vmem>>, vector<1x32xf32>
    %cst_121 = arith.constant dense<0.000000e+00> : vector<16xf32>
    %262 = vector.multi_reduction <add>, %259, %cst_121 [1] : vector<16x32xf32> to vector<16xf32>
    %263 = vector.shape_cast %262 : vector<16xf32> to vector<16x1xf32>
    %cst_122 = arith.constant 3.200000e+01 : f32
    %264 = vector.broadcast %cst_122 : f32 to vector<16x1xf32>
    %265 = arith.divf %263, %264 : vector<16x1xf32>
    %266 = vector.broadcast %265 : vector<16x1xf32> to vector<16x32xf32>
    %267 = arith.subf %259, %266 : vector<16x32xf32>
    %268 = arith.mulf %267, %267 : vector<16x32xf32>
    %cst_123 = arith.constant dense<0.000000e+00> : vector<16xf32>
    %269 = vector.multi_reduction <add>, %268, %cst_123 [1] : vector<16x32xf32> to vector<16xf32>
    %270 = vector.shape_cast %269 : vector<16xf32> to vector<16x1xf32>
    %cst_124 = arith.constant 3.200000e+01 : f32
    %271 = vector.broadcast %cst_124 : f32 to vector<16x1xf32>
    %272 = arith.divf %270, %271 : vector<16x1xf32>
    %273 = vector.broadcast %265 : vector<16x1xf32> to vector<16x32xf32>
    %274 = arith.subf %259, %273 : vector<16x32xf32>
    %cst_125 = arith.constant 9.99999974E-6 : f32
    %275 = vector.broadcast %cst_125 : f32 to vector<16x1xf32>
    %276 = arith.addf %272, %275 : vector<16x1xf32>
    %277 = math.rsqrt %276 : vector<16x1xf32>
    %278 = vector.broadcast %277 : vector<16x1xf32> to vector<16x32xf32>
    %279 = arith.mulf %274, %278 : vector<16x32xf32>
    %280 = vector.broadcast %260 : vector<1x32xf32> to vector<16x32xf32>
    %281 = arith.mulf %279, %280 : vector<16x32xf32>
    %282 = vector.broadcast %261 : vector<1x32xf32> to vector<16x32xf32>
    %283 = arith.addf %281, %282 : vector<16x32xf32>
    %284 = arith.truncf %283 : vector<16x32xf32> to vector<16x32xbf16>
    %c0_126 = arith.constant 0 : index
    %c0_127 = arith.constant 0 : index
    %285 = vector.load %arg16[%c0_126, %c0_127] : memref<32x128xbf16, #tpu.memory_space<vmem>>, vector<32x128xbf16>
    %cst_128 = arith.constant dense<0.000000e+00> : vector<16x128xf32>
    %286 = tpu.matmul %284, %285, %cst_128 {dimension_numbers = #tpu.dot_dimension_numbers<[1], [0], [0], [1], [0, 0, 1, 1], [], []>} : vector<16x32xbf16>, vector<32x128xbf16>, vector<16x128xf32> -> vector<16x128xf32>
    %c0_129 = arith.constant 0 : index
    %c0_130 = arith.constant 0 : index
    %287 = vector.load %arg17[%c0_129, %c0_130] : memref<1x128xf32, #tpu.memory_space<vmem>>, vector<1x128xf32>
    %288 = vector.broadcast %287 : vector<1x128xf32> to vector<16x128xf32>
    %289 = arith.addf %286, %288 : vector<16x128xf32>
    %c0_131 = arith.constant 0 : index
    %c0_132 = arith.constant 0 : index
    %290 = vector.load %arg18[%c0_131, %c0_132] : memref<16x128xf32, #tpu.memory_space<vmem>>, vector<16x128xf32>
    tpu.vector_store %arg18[%c0_131, %c0_132], %289 {strides = array<i32>} : memref<16x128xf32, #tpu.memory_space<vmem>>, vector<16x128xf32>,
    return
  }
  func.func @transform_0(%arg0: i32) -> (i32, i32) {
    %c0_i32 = arith.constant 0 : i32
    %c0_i32_0 = arith.constant 0 : i32
    %c0_i32_1 = arith.constant 0 : i32
    return %c0_i32, %c0_i32_0 : i32, i32
  }
  func.func @transform_1(%arg0: i32) -> (i32, i32) {
    %c0_i32 = arith.constant 0 : i32
    %c0_i32_0 = arith.constant 0 : i32
    %c0_i32_1 = arith.constant 0 : i32
    return %c0_i32, %c0_i32_0 : i32, i32
  }
  func.func @transform_2(%arg0: i32) -> (i32, i32, i32) {
    %c0_i32 = arith.constant 0 : i32
    %c0_i32_0 = arith.constant 0 : i32
    %c0_i32_1 = arith.constant 0 : i32
    %c0_i32_2 = arith.constant 0 : i32
    return %c0_i32, %c0_i32_0, %c0_i32_1 : i32, i32, i32
  }
  func.func @transform_3(%arg0: i32) -> (i32, i32, i32) {
    %c0_i32 = arith.constant 0 : i32
    %c0_i32_0 = arith.constant 0 : i32
    %c0_i32_1 = arith.constant 0 : i32
    %c0_i32_2 = arith.constant 0 : i32
    return %c0_i32, %c0_i32_0, %c0_i32_1 : i32, i32, i32
  }
  func.func @transform_4(%arg0: i32) -> (i32, i32, i32) {
    %c0_i32 = arith.constant 0 : i32
    %c0_i32_0 = arith.constant 0 : i32
    %c0_i32_1 = arith.constant 0 : i32
    %c0_i32_2 = arith.constant 0 : i32
    return %c0_i32, %c0_i32_0, %c0_i32_1 : i32, i32, i32
  }
  func.func @transform_5(%arg0: i32) -> (i32, i32, i32) {
    %c0_i32 = arith.constant 0 : i32
    %c0_i32_0 = arith.constant 0 : i32
    %c0_i32_1 = arith.constant 0 : i32
    %c0_i32_2 = arith.constant 0 : i32
    return %c0_i32, %c0_i32_0, %c0_i32_1 : i32, i32, i32
  }
  func.func @transform_6(%arg0: i32) -> (i32, i32, i32) {
    %c0_i32 = arith.constant 0 : i32
    %c0_i32_0 = arith.constant 0 : i32
    %c0_i32_1 = arith.constant 0 : i32
    %c0_i32_2 = arith.constant 0 : i32
    return %c0_i32, %c0_i32_0, %c0_i32_1 : i32, i32, i32
  }
  func.func @transform_7(%arg0: i32) -> (i32, i32, i32) {
    %c0_i32 = arith.constant 0 : i32
    %c0_i32_0 = arith.constant 0 : i32
    %c0_i32_1 = arith.constant 0 : i32
    %c0_i32_2 = arith.constant 0 : i32
    return %c0_i32, %c0_i32_0, %c0_i32_1 : i32, i32, i32
  }
  func.func @transform_8(%arg0: i32) -> (i32, i32, i32) {
    %c0_i32 = arith.constant 0 : i32
    %c0_i32_0 = arith.constant 0 : i32
    %c0_i32_1 = arith.constant 0 : i32
    %c0_i32_2 = arith.constant 0 : i32
    return %c0_i32, %c0_i32_0, %c0_i32_1 : i32, i32, i32
  }
  func.func @transform_9(%arg0: i32) -> (i32, i32, i32) {
    %c0_i32 = arith.constant 0 : i32
    %c0_i32_0 = arith.constant 0 : i32
    %c0_i32_1 = arith.constant 0 : i32
    %c0_i32_2 = arith.constant 0 : i32
    return %c0_i32, %c0_i32_0, %c0_i32_1 : i32, i32, i32
  }
  func.func @transform_10(%arg0: i32) -> (i32, i32, i32) {
    %c0_i32 = arith.constant 0 : i32
    %c0_i32_0 = arith.constant 0 : i32
    %c0_i32_1 = arith.constant 0 : i32
    %c0_i32_2 = arith.constant 0 : i32
    return %c0_i32, %c0_i32_0, %c0_i32_1 : i32, i32, i32
  }
  func.func @transform_11(%arg0: i32) -> (i32, i32, i32) {
    %c0_i32 = arith.constant 0 : i32
    %c0_i32_0 = arith.constant 0 : i32
    %c0_i32_1 = arith.constant 0 : i32
    %c0_i32_2 = arith.constant 0 : i32
    return %c0_i32, %c0_i32_0, %c0_i32_1 : i32, i32, i32
  }
  func.func @transform_12(%arg0: i32) -> (i32, i32, i32) {
    %c0_i32 = arith.constant 0 : i32
    %c0_i32_0 = arith.constant 0 : i32
    %c0_i32_1 = arith.constant 0 : i32
    %c0_i32_2 = arith.constant 0 : i32
    return %c0_i32, %c0_i32_0, %c0_i32_1 : i32, i32, i32
  }
  func.func @transform_13(%arg0: i32) -> (i32, i32) {
    %c0_i32 = arith.constant 0 : i32
    %c0_i32_0 = arith.constant 0 : i32
    %c0_i32_1 = arith.constant 0 : i32
    return %c0_i32, %c0_i32_0 : i32, i32
  }
  func.func @transform_14(%arg0: i32) -> (i32, i32) {
    %c0_i32 = arith.constant 0 : i32
    %c0_i32_0 = arith.constant 0 : i32
    %c0_i32_1 = arith.constant 0 : i32
    return %c0_i32, %c0_i32_0 : i32, i32
  }
  func.func @transform_15(%arg0: i32) -> (i32, i32) {
    %c0_i32 = arith.constant 0 : i32
    %c0_i32_0 = arith.constant 0 : i32
    %c0_i32_1 = arith.constant 0 : i32
    return %c0_i32, %c0_i32_0 : i32, i32
  }
  func.func @transform_16(%arg0: i32) -> (i32, i32) {
    %c0_i32 = arith.constant 0 : i32
    %c0_i32_0 = arith.constant 0 : i32
    %c0_i32_1 = arith.constant 0 : i32
    return %c0_i32, %c0_i32_0 : i32, i32
  }
  func.func @transform_17(%arg0: i32) -> (i32, i32) {
    %c0_i32 = arith.constant 0 : i32
    %c0_i32_0 = arith.constant 0 : i32
    %c0_i32_1 = arith.constant 0 : i32
    return %c0_i32, %c0_i32_0 : i32, i32
  }
}

</mosaic_0001>

<llo_original>
// kernel: tpu_custom_call.1
$region0: #{tpu_custom_call.1}
  #allocation0 [shape = 'u32[]', space=smem, size = 0x4, offset = 0x4, fixed_abs, tag = 'smem constant byte address 0x4 - core index']
  #allocation1 [shape = 'u32[144,128]{1,0:T(1,128)}', space=vmem, size = 0x12000, scoped, tag = 'internal scratch']
  %s0 = inlined_call_operand.vmem [shape: f32[16,32], index: 0, kind: input, shape index: {}]
  %s1 = inlined_call_operand.vmem [shape: f32[16,16], index: 1, kind: input, shape index: {}]
  %s2 = inlined_call_operand.vmem [shape: f32[2,1,32], index: 2, kind: input, shape index: {}]
  %s3 = inlined_call_operand.vmem [shape: f32[2,1,32], index: 3, kind: input, shape index: {}]
  %s4 = inlined_call_operand.vmem [shape: bf16[2,32,96], index: 4, kind: input, shape index: {}]
  %s5 = inlined_call_operand.vmem [shape: bf16[2,32,32], index: 5, kind: input, shape index: {}]
  %s6 = inlined_call_operand.vmem [shape: f32[2,1,32], index: 6, kind: input, shape index: {}]
  %s7 = inlined_call_operand.vmem [shape: f32[2,1,32], index: 7, kind: input, shape index: {}]
  %s8 = inlined_call_operand.vmem [shape: f32[2,1,32], index: 8, kind: input, shape index: {}]
  %s9 = inlined_call_operand.vmem [shape: bf16[2,32,128], index: 9, kind: input, shape index: {}]
  %s10 = inlined_call_operand.vmem [shape: f32[2,1,128], index: 10, kind: input, shape index: {}]
  %s11 = inlined_call_operand.vmem [shape: bf16[2,128,32], index: 11, kind: input, shape index: {}]
  %s12 = inlined_call_operand.vmem [shape: f32[2,1,32], index: 12, kind: input, shape index: {}]
  %s13 = inlined_call_operand.vmem [shape: f32[1,32], index: 13, kind: input, shape index: {}]
  %s14 = inlined_call_operand.vmem [shape: f32[1,32], index: 14, kind: input, shape index: {}]
  %s15 = inlined_call_operand.vmem [shape: bf16[32,128], index: 15, kind: input, shape index: {}]
  %s16 = inlined_call_operand.vmem [shape: f32[1,128], index: 16, kind: input, shape index: {}]
  %s17 = inlined_call_operand.hbm [shape: f32[16,128], index: 17, kind: output, shape index: {}]
  %s18 = sld [smem:[#allocation0]]
  $region78: #{tpu_custom_call.1} parent=0
    _
  %s20 = ssub.s32 1, %s18
  %s21 = scalar_select 0, %s20, %s18
  $region1: #{tpu_custom_call.1} parent=0
    #allocation2 [shape = 'u8[8192]{0}', space=vmem, size = 0x2000, scoped, tag = 'output window, operand 0, single buffered']
    #allocation3 [shape = 's32[1]{0}', space=sflag, size = 0x4, scoped, tag = 'scoped memory for tpu_custom_call.1']
    %22 = vsyncpa [#allocation3], 0
    // Predicated region
    $region2: #{tpu_custom_call.1} parent=1 // pred_check
      _
    $region3: #{tpu_custom_call.1} parent=1 // pred_check_branch
      %24 = sbr.rel (0) target = $region5
    $region4: #{tpu_custom_call.1} parent=1 // pred_region
      _
    $region5: #{tpu_custom_call.1} parent=1 // pred_fallthru
      _
    // Predicated region
    $region6: #{tpu_custom_call.1} parent=1 // pred_check
      _
    $region7: #{tpu_custom_call.1} parent=1 // pred_check_branch
      %26 = sbr.rel (0) target = $region9
    $region8: #{tpu_custom_call.1} parent=1 // pred_region
      _
    $region9: #{tpu_custom_call.1} parent=1 // pred_fallthru
      _
    // Predicated region
    $region10: #{tpu_custom_call.1} parent=1 // pred_check
      _
    $region11: #{tpu_custom_call.1} parent=1 // pred_check_branch
      %28 = sbr.rel (0) target = $region13
    $region12: #{tpu_custom_call.1} parent=1 // pred_region
      _
    $region13: #{tpu_custom_call.1} parent=1 // pred_fallthru
      _
    // Predicated region
    $region14: #{tpu_custom_call.1} parent=1 // pred_check
      _
    $region15: #{tpu_custom_call.1} parent=1 // pred_check_branch
      %30 = sbr.rel (0) target = $region17
    $region16: #{tpu_custom_call.1} parent=1 // pred_region
      _
    $region17: #{tpu_custom_call.1} parent=1 // pred_fallthru
      _
    // Predicated region
    $region18: #{tpu_custom_call.1} parent=1 // pred_check
      _
    $region19: #{tpu_custom_call.1} parent=1 // pred_check_branch
      %32 = sbr.rel (0) target = $region21
    $region20: #{tpu_custom_call.1} parent=1 // pred_region
      _
    $region21: #{tpu_custom_call.1} parent=1 // pred_fallthru
      _
    // Predicated region
    $region22: #{tpu_custom_call.1} parent=1 // pred_check
      _
    $region23: #{tpu_custom_call.1} parent=1 // pred_check_branch
      %34 = sbr.rel (0) target = $region25
    $region24: #{tpu_custom_call.1} parent=1 // pred_region
      _
    $region25: #{tpu_custom_call.1} parent=1 // pred_fallthru
      _
    // Predicated region
    $region26: #{tpu_custom_call.1} parent=1 // pred_check
      _
    $region27: #{tpu_custom_call.1} parent=1 // pred_check_branch
      %36 = sbr.rel (0) target = $region29
    $region28: #{tpu_custom_call.1} parent=1 // pred_region
      _
    $region29: #{tpu_custom_call.1} parent=1 // pred_fallthru
      _
    // Predicated region
    $region30: #{tpu_custom_call.1} parent=1 // pred_check
      _
    $region31: #{tpu_custom_call.1} parent=1 // pred_check_branch
      %38 = sbr.rel (0) target = $region33
    $region32: #{tpu_custom_call.1} parent=1 // pred_region
      _
    $region33: #{tpu_custom_call.1} parent=1 // pred_fallthru
      _
    // Predicated region
    $region34: #{tpu_custom_call.1} parent=1 // pred_check
      _
    $region35: #{tpu_custom_call.1} parent=1 // pred_check_branch
      %40 = sbr.rel (0) target = $region37
    $region36: #{tpu_custom_call.1} parent=1 // pred_region
      _
    $region37: #{tpu_custom_call.1} parent=1 // pred_fallthru
      _
    // Predicated region
    $region38: #{tpu_custom_call.1} parent=1 // pred_check
      _
    $region39: #{tpu_custom_call.1} parent=1 // pred_check_branch
      %42 = sbr.rel (0) target = $region41
    $region40: #{tpu_custom_call.1} parent=1 // pred_region
      _
    $region41: #{tpu_custom_call.1} parent=1 // pred_fallthru
      _
    // Predicated region
    $region42: #{tpu_custom_call.1} parent=1 // pred_check
      _
    $region43: #{tpu_custom_call.1} parent=1 // pred_check_branch
      %44 = sbr.rel (0) target = $region45
    $region44: #{tpu_custom_call.1} parent=1 // pred_region
      _
    $region45: #{tpu_custom_call.1} parent=1 // pred_fallthru
      _
    // Predicated region
    $region46: #{tpu_custom_call.1} parent=1 // pred_check
      _
    $region47: #{tpu_custom_call.1} parent=1 // pred_check_branch
      %46 = sbr.rel (0) target = $region49
    $region48: #{tpu_custom_call.1} parent=1 // pred_region
      _
    $region49: #{tpu_custom_call.1} parent=1 // pred_fallthru
      _
    // Predicated region
    $region50: #{tpu_custom_call.1} parent=1 // pred_check
      _
    $region51: #{tpu_custom_call.1} parent=1 // pred_check_branch
      %48 = sbr.rel (0) target = $region53
    $region52: #{tpu_custom_call.1} parent=1 // pred_region
      _
    $region53: #{tpu_custom_call.1} parent=1 // pred_fallthru
      _
    // Predicated region
    $region54: #{tpu_custom_call.1} parent=1 // pred_check
      _
    $region55: #{tpu_custom_call.1} parent=1 // pred_check_branch
      %50 = sbr.rel (0) target = $region57
    $region56: #{tpu_custom_call.1} parent=1 // pred_region
      _
    $region57: #{tpu_custom_call.1} parent=1 // pred_fallthru
      _
    // Predicated region
    $region58: #{tpu_custom_call.1} parent=1 // pred_check
      _
    $region59: #{tpu_custom_call.1} parent=1 // pred_check_branch
      %52 = sbr.rel (0) target = $region61
    $region60: #{tpu_custom_call.1} parent=1 // pred_region
      _
    $region61: #{tpu_custom_call.1} parent=1 // pred_fallthru
      _
    // Predicated region
    $region62: #{tpu_custom_call.1} parent=1 // pred_check
      _
    $region63: #{tpu_custom_call.1} parent=1 // pred_check_branch
      %54 = sbr.rel (0) target = $region65
    $region64: #{tpu_custom_call.1} parent=1 // pred_region
      _
    $region65: #{tpu_custom_call.1} parent=1 // pred_fallthru
      _
    // Predicated region
    $region66: #{tpu_custom_call.1} parent=1 // pred_check
      _
    $region67: #{tpu_custom_call.1} parent=1 // pred_check_branch
      %56 = sbr.rel (0) target = $region69
    $region68: #{tpu_custom_call.1} parent=1 // pred_region
      _
    $region69: #{tpu_custom_call.1} parent=1 // pred_fallthru
      _
    %v58 = vld [vmem:[%s1] sm:$0xff]
    %v59 = vld [vmem:[%s1 + $0x8] sm:$0xff]
    %v60 = vld [vmem:[%s0] sm:$0xff]
    %v61 = vld [vmem:[%s0 + $0x8] sm:$0xff]
    %v62 = vld [vmem:[%s2] sm:$0x1]
    %v63 = vld [vmem:[%s3] sm:$0x1]
    %vm64 = vcmask 261120
    %v65 = vsel %vm64, %v60, 0.0
    %66 = vadd.xlane.f32.xlu0 %v65
    %v67 = vpop.xlane.xlu0 %66
    %v68 = vsel %vm64, %v61, 0.0
    %69 = vadd.xlane.f32.xlu0 %v68
    %v70 = vpop.xlane.xlu0 %69
    %v71 = vrcp.pop 32.0
    %v72 = vmul.f32 %v67, %v71
    %v73 = vmul.f32 %v70, %v71
    %v74 = vsub.f32 %v60, %v72
    %v75 = vsub.f32 %v61, %v73
    %v76 = vmul.f32 %v74, %v74
    %v77 = vmul.f32 %v75, %v75
    %v78 = vsel %vm64, %v76, 0.0
    %79 = vadd.xlane.f32.xlu0 %v78
    %v80 = vpop.xlane.xlu0 %79
    %v81 = vsel %vm64, %v77, 0.0
    %82 = vadd.xlane.f32.xlu0 %v81
    %v83 = vpop.xlane.xlu0 %82
    %v84 = vmul.f32 %v80, %v71
    %v85 = vmul.f32 %v83, %v71
    %v86 = vadd.f32 %v84, 1e-05
    %v87 = vadd.f32 %v85, 1e-05
    %v88 = vrsqrt.pop %v86
    %v89 = vrsqrt.pop %v87
    %v90 = vmul.f32 %v74, %v88
    %v91 = vmul.f32 %v75, %v89
    %v93 = vlaneseq
    %v94 = vshrl.u32 %v93, 7
    %v95 = vsub.s32 0, %v94
    %v96 = vrot.slane %v62, %v95
    %v98 = vmul.f32 %v90, %v96
    %v99 = vmul.f32 %v91, %v96
    %v101 = vlaneseq
    %v102 = vshrl.u32 %v101, 7
    %v103 = vsub.s32 0, %v102
    %v104 = vrot.slane %v63, %v103
    %v106 = vadd.f32 %v98, %v104
    %v107 = vadd.f32 %v99, %v104
    %v108 = vpack.c.bf16 %v107, %v106
    %v109 = vld [vmem:[%s4] sm:$0xf]
    %v110 = vld [vmem:[%s4 + $0x4] sm:$0xf]
    %v111 = vld [vmem:[%s4 + $0x8] sm:$0xf]
    %v112 = vld [vmem:[%s4 + $0xc] sm:$0xf]
    %v117 = vunpack.c.l.b16 %v109
    %v118 = vunpack.c.l.b16 %v110
    %v119 = vunpack.c.l.b16 %v111
    %v120 = vunpack.c.l.b16 %v112
    %v121 = vpack.c.b16 %v118, %v117
    %v122 = vpack.c.b16 %v120, %v119
    %v126 = vsel %vm64, %v108, 0
    %128 = vmatprep.subr.bf16.mxu0 0
    %129 = vmatpush1.bf16.msra.mxu0 %v121
    %130 = vmatprep.subr.bf16.mxu0 0
    %131 = vmatpush1.bf16.msra.mxu0 %v122
    %132 = vmatprep.subr.bf16.mxu0 0
    %133 = vmatpush1.bf16.msra.mxu0 0
    %134 = vmatprep.subr.bf16.mxu0 0
    %135 = vmatpush1.bf16.msra.mxu0 0
    %136 = vmatprep.subr.bf16.mxu0 0
    %137 = vmatpush1.bf16.msra.mxu0 0
    %138 = vmatprep.subr.bf16.mxu0 0
    %139 = vmatpush1.bf16.msra.mxu0 0
    %140 = vmatprep.subr.bf16.mxu0 0
    %141 = vmatpush1.bf16.msra.mxu0 0
    %142 = vmatprep.subr.bf16.mxu0 0
    %143 = vmatpush1.bf16.msra.mxu0 0
    %144 = vmatprep.subr.bf16.mxu0 0
    %145 = vmatpush1.bf16.msra.mxu0 0
    %146 = vmatprep.subr.bf16.mxu0 0
    %147 = vmatpush1.bf16.msra.mxu0 0
    %148 = vmatprep.subr.bf16.mxu0 0
    %149 = vmatpush1.bf16.msra.mxu0 0
    %150 = vmatprep.subr.bf16.mxu0 0
    %151 = vmatpush1.bf16.msra.mxu0 0
    %152 = vmatprep.subr.bf16.mxu0 0
    %153 = vmatpush1.bf16.msra.mxu0 0
    %154 = vmatprep.subr.bf16.mxu0 0
    %155 = vmatpush1.bf16.msra.mxu0 0
    %156 = vmatprep.subr.bf16.mxu0 0
    %157 = vmatpush1.bf16.msra.mxu0 0
    %158 = vmatprep.subr.bf16.mxu0 0
    %159 = vmatpush1.bf16.msra.mxu0 0
    %160 = vmatprep.mubr.bf16.mxu0 0
    %161 = vmatmul.mubr.bf16.gmra.mrb[0].mxu0 %v126
    %v162 = vpop.f32.mrb[0].mxu0
    %v163 = vadd.f32 0.0, %v162
    %v164 = vpop.f32.mrb[0].mxu0
    %v165 = vpop.f32.mrb[0].mxu0
    %v166 = vadd.f32 0.0, %v165
    %v167 = vpop.f32.mrb[0].mxu0
    %168 = vdwg.mxu0
    %v169 = vpack.c.bf16 %v166, %v163
    %171 = vrot.lane.b32.xlu0 %v169, 96
    %v172 = vpop.permute.xlu0 %171
    %vm173 = vcmask 130048
    %v175 = vsel %vm173, %v169, 0
    %v178 = vsel %vm173, %v172, 0
    %180 = vmatprep.subr.bf16.mxu0 0
    %181 = vmatpush1.bf16.xpose.msra.mxu0 %v178
    %182 = vmatprep.subr.bf16.mxu0 0
    %183 = vmatpush1.bf16.xpose.msra.mxu0 0
    %184 = vmatprep.subr.bf16.mxu0 0
    %185 = vmatpush1.bf16.xpose.msra.mxu0 0
    %186 = vmatprep.subr.bf16.mxu0 0
    %187 = vmatpush1.bf16.xpose.msra.mxu0 0
    %188 = vmatprep.subr.bf16.mxu0 0
    %189 = vmatpush1.bf16.xpose.msra.mxu0 0
    %190 = vmatprep.subr.bf16.mxu0 0
    %191 = vmatpush1.bf16.xpose.msra.mxu0 0
    %192 = vmatprep.subr.bf16.mxu0 0
    %193 = vmatpush1.bf16.xpose.msra.mxu0 0
    %194 = vmatprep.subr.bf16.mxu0 0
    %195 = vmatpush1.bf16.xpose.msra.mxu0 0
    %196 = vmatprep.subr.bf16.mxu0 0
    %197 = vmatpush1.bf16.xpose.msra.mxu0 0
    %198 = vmatprep.subr.bf16.mxu0 0
    %199 = vmatpush1.bf16.xpose.msra.mxu0 0
    %200 = vmatprep.subr.bf16.mxu0 0
    %201 = vmatpush1.bf16.xpose.msra.mxu0 0
    %202 = vmatprep.subr.bf16.mxu0 0
    %203 = vmatpush1.bf16.xpose.msra.mxu0 0
    %204 = vmatprep.subr.bf16.mxu0 0
    %205 = vmatpush1.bf16.xpose.msra.mxu0 0
    %206 = vmatprep.subr.bf16.mxu0 0
    %207 = vmatpush1.bf16.xpose.msra.mxu0 0
    %208 = vmatprep.subr.bf16.mxu0 0
    %209 = vmatpush1.bf16.xpose.msra.mxu0 0
    %210 = vmatprep.subr.bf16.mxu0 0
    %211 = vmatpush1.bf16.xpose.msra.mxu0 0
    %212 = vmatprep.mubr.bf16.mxu0 0
    %213 = vmatmul.mubr.bf16.gmra.mrb[0].mxu0 %v175
    %v214 = vpop.f32.mrb[0].mxu0
    %v215 = vadd.f32 0.0, %v214
    %v216 = vpop.f32.mrb[0].mxu0
    %v217 = vpop.f32.mrb[0].mxu0
    %v218 = vadd.f32 0.0, %v217
    %v219 = vpop.f32.mrb[0].mxu0
    %220 = vdwg.mxu0
    %v221 = vmul.f32 %v215, 0.17677669
    %v222 = vmul.f32 %v218, 0.17677669
    %v223 = vadd.f32 %v221, %v58
    %v224 = vadd.f32 %v222, %v59
    %v225 = vsel %vm173, %v223, -inf
    %226 = vmax.xlane.f32.xlu0 %v225
    %v227 = vpop.xlane.xlu0 %226
    %v228 = vsel %vm173, %v224, -inf
    %229 = vmax.xlane.f32.xlu0 %v228
    %v230 = vpop.xlane.xlu0 %229
    %v231 = vsub.f32 %v223, %v227
    %v232 = vsub.f32 %v224, %v230
    %v233 = vmul.f32 %v231, 1.442695
    %v234 = vpow.pop %v233
    %v235 = vmul.f32 %v232, 1.442695
    %v236 = vpow.pop %v235
    %v237 = vsel %vm173, %v234, 0.0
    %238 = vadd.xlane.f32.xlu0 %v237
    %v239 = vpop.xlane.xlu0 %238
    %v240 = vsel %vm173, %v236, 0.0
    %241 = vadd.xlane.f32.xlu0 %v240
    %v242 = vpop.xlane.xlu0 %241
    %v243 = vrcp.pop %v239
    %v244 = vrcp.pop %v242
    %v245 = vmul.f32 %v234, %v243
    %v246 = vmul.f32 %v236, %v244
    %v247 = vpack.c.bf16 %v246, %v245
    %248 = vrot.lane.b32.xlu0 %v169, 64
    %v249 = vpop.permute.xlu0 %248
    %v252 = vsel %vm173, %v247, 0
    %254 = vmatprep.subr.bf16.mxu0 0
    %255 = vmatpush1.bf16.msra.mxu0 %v249
    %256 = vmatprep.subr.bf16.mxu0 0
    %257 = vmatpush1.bf16.msra.mxu0 0
    %258 = vmatprep.subr.bf16.mxu0 0
    %259 = vmatpush1.bf16.msra.mxu0 0
    %260 = vmatprep.subr.bf16.mxu0 0
    %261 = vmatpush1.bf16.msra.mxu0 0
    %262 = vmatprep.subr.bf16.mxu0 0
    %263 = vmatpush1.bf16.msra.mxu0 0
    %264 = vmatprep.subr.bf16.mxu0 0
    %265 = vmatpush1.bf16.msra.mxu0 0
    %266 = vmatprep.subr.bf16.mxu0 0
    %267 = vmatpush1.bf16.msra.mxu0 0
    %268 = vmatprep.subr.bf16.mxu0 0
    %269 = vmatpush1.bf16.msra.mxu0 0
    %270 = vmatprep.subr.bf16.mxu0 0
    %271 = vmatpush1.bf16.msra.mxu0 0
    %272 = vmatprep.subr.bf16.mxu0 0
    %273 = vmatpush1.bf16.msra.mxu0 0
    %274 = vmatprep.subr.bf16.mxu0 0
    %275 = vmatpush1.bf16.msra.mxu0 0
    %276 = vmatprep.subr.bf16.mxu0 0
    %277 = vmatpush1.bf16.msra.mxu0 0
    %278 = vmatprep.subr.bf16.mxu0 0
    %279 = vmatpush1.bf16.msra.mxu0 0
    %280 = vmatprep.subr.bf16.mxu0 0
    %281 = vmatpush1.bf16.msra.mxu0 0
    %282 = vmatprep.subr.bf16.mxu0 0
    %283 = vmatpush1.bf16.msra.mxu0 0
    %284 = vmatprep.subr.bf16.mxu0 0
    %285 = vmatpush1.bf16.msra.mxu0 0
    %286 = vmatprep.mubr.bf16.mxu0 0
    %287 = vmatmul.mubr.bf16.gmra.mrb[0].mxu0 %v252
    %v288 = vpop.f32.mrb[0].mxu0
    %v289 = vadd.f32 0.0, %v288
    %v290 = vpop.f32.mrb[0].mxu0
    %v291 = vpop.f32.mrb[0].mxu0
    %v292 = vadd.f32 0.0, %v291
    %v293 = vpop.f32.mrb[0].mxu0
    %294 = vdwg.mxu0
    %295 = vrot.lane.b32.xlu0 %v169, 112
    %v296 = vpop.permute.xlu0 %295
    %297 = vrot.lane.b32.xlu0 %v169, 80
    %v298 = vpop.permute.xlu0 %297
    %v300 = vsel %vm173, %v296, 0
    %v303 = vsel %vm173, %v298, 0
    %305 = vmatprep.subr.bf16.mxu0 0
    %306 = vmatpush1.bf16.xpose.msra.mxu0 %v303
    %307 = vmatprep.subr.bf16.mxu0 0
    %308 = vmatpush1.bf16.xpose.msra.mxu0 0
    %309 = vmatprep.subr.bf16.mxu0 0
    %310 = vmatpush1.bf16.xpose.msra.mxu0 0
    %311 = vmatprep.subr.bf16.mxu0 0
    %312 = vmatpush1.bf16.xpose.msra.mxu0 0
    %313 = vmatprep.subr.bf16.mxu0 0
    %314 = vmatpush1.bf16.xpose.msra.mxu0 0
    %315 = vmatprep.subr.bf16.mxu0 0
    %316 = vmatpush1.bf16.xpose.msra.mxu0 0
    %317 = vmatprep.subr.bf16.mxu0 0
    %318 = vmatpush1.bf16.xpose.msra.mxu0 0
    %319 = vmatprep.subr.bf16.mxu0 0
    %320 = vmatpush1.bf16.xpose.msra.mxu0 0
    %321 = vmatprep.subr.bf16.mxu0 0
    %322 = vmatpush1.bf16.xpose.msra.mxu0 0
    %323 = vmatprep.subr.bf16.mxu0 0
    %324 = vmatpush1.bf16.xpose.msra.mxu0 0
    %325 = vmatprep.subr.bf16.mxu0 0
    %326 = vmatpush1.bf16.xpose.msra.mxu0 0
    %327 = vmatprep.subr.bf16.mxu0 0
    %328 = vmatpush1.bf16.xpose.msra.mxu0 0
    %329 = vmatprep.subr.bf16.mxu0 0
    %330 = vmatpush1.bf16.xpose.msra.mxu0 0
    %331 = vmatprep.subr.bf16.mxu0 0
    %332 = vmatpush1.bf16.xpose.msra.mxu0 0
    %333 = vmatprep.subr.bf16.mxu0 0
    %334 = vmatpush1.bf16.xpose.msra.mxu0 0
    %335 = vmatprep.subr.bf16.mxu0 0
    %336 = vmatpush1.bf16.xpose.msra.mxu0 0
    %337 = vmatprep.mubr.bf16.mxu0 0
    %338 = vmatmul.mubr.bf16.gmra.mrb[0].mxu0 %v300
    %v339 = vpop.f32.mrb[0].mxu0
    %v340 = vadd.f32 0.0, %v339
    %v341 = vpop.f32.mrb[0].mxu0
    %v342 = vpop.f32.mrb[0].mxu0
    %v343 = vadd.f32 0.0, %v342
    %v344 = vpop.f32.mrb[0].mxu0
    %345 = vdwg.mxu0
    %v346 = vmul.f32 %v340, 0.17677669
    %v347 = vmul.f32 %v343, 0.17677669
    %v348 = vadd.f32 %v346, %v58
    %v349 = vadd.f32 %v347, %v59
    %v350 = vsel %vm173, %v348, -inf
    %351 = vmax.xlane.f32.xlu0 %v350
    %v352 = vpop.xlane.xlu0 %351
    %v353 = vsel %vm173, %v349, -inf
    %354 = vmax.xlane.f32.xlu0 %v353
    %v355 = vpop.xlane.xlu0 %354
    %v356 = vsub.f32 %v348, %v352
    %v357 = vsub.f32 %v349, %v355
    %v358 = vmul.f32 %v356, 1.442695
    %v359 = vpow.pop %v358
    %v360 = vmul.f32 %v357, 1.442695
    %v361 = vpow.pop %v360
    %v362 = vsel %vm173, %v359, 0.0
    %363 = vadd.xlane.f32.xlu0 %v362
    %v364 = vpop.xlane.xlu0 %363
    %v365 = vsel %vm173, %v361, 0.0
    %366 = vadd.xlane.f32.xlu0 %v365
    %v367 = vpop.xlane.xlu0 %366
    %v368 = vrcp.pop %v364
    %v369 = vrcp.pop %v367
    %v370 = vmul.f32 %v359, %v368
    %v371 = vmul.f32 %v361, %v369
    %v372 = vpack.c.bf16 %v371, %v370
    %373 = vrot.lane.b32.xlu0 %v169, 48
    %v374 = vpop.permute.xlu0 %373
    %v377 = vsel %vm173, %v372, 0
    %379 = vmatprep.subr.bf16.mxu0 0
    %380 = vmatpush1.bf16.msra.mxu0 %v374
    %381 = vmatprep.subr.bf16.mxu0 0
    %382 = vmatpush1.bf16.msra.mxu0 0
    %383 = vmatprep.subr.bf16.mxu0 0
    %384 = vmatpush1.bf16.msra.mxu0 0
    %385 = vmatprep.subr.bf16.mxu0 0
    %386 = vmatpush1.bf16.msra.mxu0 0
    %387 = vmatprep.subr.bf16.mxu0 0
    %388 = vmatpush1.bf16.msra.mxu0 0
    %389 = vmatprep.subr.bf16.mxu0 0
    %390 = vmatpush1.bf16.msra.mxu0 0
    %391 = vmatprep.subr.bf16.mxu0 0
    %392 = vmatpush1.bf16.msra.mxu0 0
    %393 = vmatprep.subr.bf16.mxu0 0
    %394 = vmatpush1.bf16.msra.mxu0 0
    %395 = vmatprep.subr.bf16.mxu0 0
    %396 = vmatpush1.bf16.msra.mxu0 0
    %397 = vmatprep.subr.bf16.mxu0 0
    %398 = vmatpush1.bf16.msra.mxu0 0
    %399 = vmatprep.subr.bf16.mxu0 0
    %400 = vmatpush1.bf16.msra.mxu0 0
    %401 = vmatprep.subr.bf16.mxu0 0
    %402 = vmatpush1.bf16.msra.mxu0 0
    %403 = vmatprep.subr.bf16.mxu0 0
    %404 = vmatpush1.bf16.msra.mxu0 0
    %405 = vmatprep.subr.bf16.mxu0 0
    %406 = vmatpush1.bf16.msra.mxu0 0
    %407 = vmatprep.subr.bf16.mxu0 0
    %408 = vmatpush1.bf16.msra.mxu0 0
    %409 = vmatprep.subr.bf16.mxu0 0
    %410 = vmatpush1.bf16.msra.mxu0 0
    %411 = vmatprep.mubr.bf16.mxu0 0
    %412 = vmatmul.mubr.bf16.gmra.mrb[0].mxu0 %v377
    %v413 = vpop.f32.mrb[0].mxu0
    %v414 = vadd.f32 0.0, %v413
    %v415 = vpop.f32.mrb[0].mxu0
    %v416 = vpop.f32.mrb[0].mxu0
    %v417 = vadd.f32 0.0, %v416
    %v418 = vpop.f32.mrb[0].mxu0
    %419 = vdwg.mxu0
    %422 = vrot.lane.b32.xlu0 %v414, 16
    %v423 = vpop.permute.xlu0 %422
    %424 = vrot.lane.b32.xlu0 %v417, 16
    %v425 = vpop.permute.xlu0 %424
    %v428 = vsel %vm173, %v289, %v423
    %v429 = vsel %vm173, %v292, %v425
    %v430 = vpack.c.bf16 %v429, %v428
    %v431 = vld [vmem:[%s5] sm:$0xf]
    %v432 = vld [vmem:[%s5 + $0x4] sm:$0xf]
    %v433 = vld [vmem:[%s5 + $0x8] sm:$0xf]
    %v434 = vld [vmem:[%s5 + $0xc] sm:$0xf]
    %v435 = vld [vmem:[%s6] sm:$0x1]
    %v437 = vlaneseq
    %v438 = vshrl.u32 %v437, 7
    %v439 = vsub.s32 0, %v438
    %v440 = vrot.slane %v435, %v439
    %v446 = vunpack.c.l.b16 %v431
    %v447 = vunpack.c.l.b16 %v432
    %v448 = vunpack.c.l.b16 %v433
    %v449 = vunpack.c.l.b16 %v434
    %v450 = vpack.c.b16 %v447, %v446
    %v451 = vpack.c.b16 %v449, %v448
    %v455 = vsel %vm64, %v430, 0
    %457 = vmatprep.subr.bf16.mxu0 0
    %458 = vmatpush1.bf16.msra.mxu0 %v450
    %459 = vmatprep.subr.bf16.mxu0 0
    %460 = vmatpush1.bf16.msra.mxu0 %v451
    %461 = vmatprep.subr.bf16.mxu0 0
    %462 = vmatpush1.bf16.msra.mxu0 0
    %463 = vmatprep.subr.bf16.mxu0 0
    %464 = vmatpush1.bf16.msra.mxu0 0
    %465 = vmatprep.subr.bf16.mxu0 0
    %466 = vmatpush1.bf16.msra.mxu0 0
    %467 = vmatprep.subr.bf16.mxu0 0
    %468 = vmatpush1.bf16.msra.mxu0 0
    %469 = vmatprep.subr.bf16.mxu0 0
    %470 = vmatpush1.bf16.msra.mxu0 0
    %471 = vmatprep.subr.bf16.mxu0 0
    %472 = vmatpush1.bf16.msra.mxu0 0
    %473 = vmatprep.subr.bf16.mxu0 0
    %474 = vmatpush1.bf16.msra.mxu0 0
    %475 = vmatprep.subr.bf16.mxu0 0
    %476 = vmatpush1.bf16.msra.mxu0 0
    %477 = vmatprep.subr.bf16.mxu0 0
    %478 = vmatpush1.bf16.msra.mxu0 0
    %479 = vmatprep.subr.bf16.mxu0 0
    %480 = vmatpush1.bf16.msra.mxu0 0
    %481 = vmatprep.subr.bf16.mxu0 0
    %482 = vmatpush1.bf16.msra.mxu0 0
    %483 = vmatprep.subr.bf16.mxu0 0
    %484 = vmatpush1.bf16.msra.mxu0 0
    %485 = vmatprep.subr.bf16.mxu0 0
    %486 = vmatpush1.bf16.msra.mxu0 0
    %487 = vmatprep.subr.bf16.mxu0 0
    %488 = vmatpush1.bf16.msra.mxu0 0
    %489 = vmatprep.mubr.bf16.mxu0 0
    %490 = vmatmul.mubr.bf16.gmra.mrb[0].mxu0 %v455
    %v491 = vpop.f32.mrb[0].mxu0
    %v492 = vadd.f32 %v440, %v491
    %v493 = vpop.f32.mrb[0].mxu0
    %v494 = vpop.f32.mrb[0].mxu0
    %v495 = vadd.f32 %v440, %v494
    %v496 = vpop.f32.mrb[0].mxu0
    %497 = vdwg.mxu0
    %v498 = vadd.f32 %v60, %v492
    %v499 = vadd.f32 %v61, %v495
    %v500 = vld [vmem:[%s7] sm:$0x1]
    %v501 = vld [vmem:[%s8] sm:$0x1]
    %v502 = vsel %vm64, %v498, 0.0
    %503 = vadd.xlane.f32.xlu0 %v502
    %v504 = vpop.xlane.xlu0 %503
    %v505 = vsel %vm64, %v499, 0.0
    %506 = vadd.xlane.f32.xlu0 %v505
    %v507 = vpop.xlane.xlu0 %506
    %v508 = vmul.f32 %v504, %v71
    %v509 = vmul.f32 %v507, %v71
    %v510 = vsub.f32 %v498, %v508
    %v511 = vsub.f32 %v499, %v509
    %v512 = vmul.f32 %v510, %v510
    %v513 = vmul.f32 %v511, %v511
    %v514 = vsel %vm64, %v512, 0.0
    %515 = vadd.xlane.f32.xlu0 %v514
    %v516 = vpop.xlane.xlu0 %515
    %v517 = vsel %vm64, %v513, 0.0
    %518 = vadd.xlane.f32.xlu0 %v517
    %v519 = vpop.xlane.xlu0 %518
    %v520 = vmul.f32 %v516, %v71
    %v521 = vmul.f32 %v519, %v71
    %v522 = vadd.f32 %v520, 1e-05
    %v523 = vadd.f32 %v521, 1e-05
    %v524 = vrsqrt.pop %v522
    %v525 = vrsqrt.pop %v523
    %v526 = vmul.f32 %v510, %v524
    %v527 = vmul.f32 %v511, %v525
    %v529 = vlaneseq
    %v530 = vshrl.u32 %v529, 7
    %v531 = vsub.s32 0, %v530
    %v532 = vrot.slane %v500, %v531
    %v534 = vmul.f32 %v526, %v532
    %v535 = vmul.f32 %v527, %v532
    %v537 = vlaneseq
    %v538 = vshrl.u32 %v537, 7
    %v539 = vsub.s32 0, %v538
    %v540 = vrot.slane %v501, %v539
    %v542 = vadd.f32 %v534, %v540
    %v543 = vadd.f32 %v535, %v540
    %v544 = vpack.c.bf16 %v543, %v542
    %v545 = vld [vmem:[%s9] sm:$0xf]
    %v546 = vld [vmem:[%s9 + $0x4] sm:$0xf]
    %v547 = vld [vmem:[%s9 + $0x8] sm:$0xf]
    %v548 = vld [vmem:[%s9 + $0xc] sm:$0xf]
    %v549 = vld [vmem:[%s10] sm:$0x1]
    %v551 = vlaneseq
    %v552 = vshrl.u32 %v551, 7
    %v553 = vsub.s32 0, %v552
    %v554 = vrot.slane %v549, %v553
    %v560 = vunpack.c.l.b16 %v545
    %v561 = vunpack.c.l.b16 %v546
    %v562 = vunpack.c.l.b16 %v547
    %v563 = vunpack.c.l.b16 %v548
    %v564 = vpack.c.b16 %v561, %v560
    %v565 = vpack.c.b16 %v563, %v562
    %v569 = vsel %vm64, %v544, 0
    %571 = vmatprep.subr.bf16.mxu0 0
    %572 = vmatpush1.bf16.msra.mxu0 %v564
    %573 = vmatprep.subr.bf16.mxu0 0
    %574 = vmatpush1.bf16.msra.mxu0 %v565
    %575 = vmatprep.subr.bf16.mxu0 0
    %576 = vmatpush1.bf16.msra.mxu0 0
    %577 = vmatprep.subr.bf16.mxu0 0
    %578 = vmatpush1.bf16.msra.mxu0 0
    %579 = vmatprep.subr.bf16.mxu0 0
    %580 = vmatpush1.bf16.msra.mxu0 0
    %581 = vmatprep.subr.bf16.mxu0 0
    %582 = vmatpush1.bf16.msra.mxu0 0
    %583 = vmatprep.subr.bf16.mxu0 0
    %584 = vmatpush1.bf16.msra.mxu0 0
    %585 = vmatprep.subr.bf16.mxu0 0
    %586 = vmatpush1.bf16.msra.mxu0 0
    %587 = vmatprep.subr.bf16.mxu0 0
    %588 = vmatpush1.bf16.msra.mxu0 0
    %589 = vmatprep.subr.bf16.mxu0 0
    %590 = vmatpush1.bf16.msra.mxu0 0
    %591 = vmatprep.subr.bf16.mxu0 0
    %592 = vmatpush1.bf16.msra.mxu0 0
    %593 = vmatprep.subr.bf16.mxu0 0
    %594 = vmatpush1.bf16.msra.mxu0 0
    %595 = vmatprep.subr.bf16.mxu0 0
    %596 = vmatpush1.bf16.msra.mxu0 0
    %597 = vmatprep.subr.bf16.mxu0 0
    %598 = vmatpush1.bf16.msra.mxu0 0
    %599 = vmatprep.subr.bf16.mxu0 0
    %600 = vmatpush1.bf16.msra.mxu0 0
    %601 = vmatprep.subr.bf16.mxu0 0
    %602 = vmatpush1.bf16.msra.mxu0 0
    %603 = vmatprep.mubr.bf16.mxu0 0
    %604 = vmatmul.mubr.bf16.gmra.mrb[0].mxu0 %v569
    %v605 = vpop.f32.mrb[0].mxu0
    %v606 = vadd.f32 %v554, %v605
    %v607 = vpop.f32.mrb[0].mxu0
    %v608 = vpop.f32.mrb[0].mxu0
    %v609 = vadd.f32 %v554, %v608
    %v610 = vpop.f32.mrb[0].mxu0
    %611 = vdwg.mxu0
    %v612 = vmax.f32 %v606, 0.0
    %v613 = vmax.f32 %v609, 0.0
    %v614 = vpack.c.bf16 %v613, %v612
    %v615 = vld [vmem:[%s11] sm:$0xf]
    %v616 = vld [vmem:[%s11 + $0x4] sm:$0xf]
    %v617 = vld [vmem:[%s11 + $0x8] sm:$0xf]
    %v618 = vld [vmem:[%s11 + $0xc] sm:$0xf]
    %v619 = vld [vmem:[%s11 + $0x10] sm:$0xf]
    %v620 = vld [vmem:[%s11 + $0x14] sm:$0xf]
    %v621 = vld [vmem:[%s11 + $0x18] sm:$0xf]
    %v622 = vld [vmem:[%s11 + $0x1c] sm:$0xf]
    %v623 = vld [vmem:[%s11 + $0x20] sm:$0xf]
    %v624 = vld [vmem:[%s11 + $0x24] sm:$0xf]
    %v625 = vld [vmem:[%s11 + $0x28] sm:$0xf]
    %v626 = vld [vmem:[%s11 + $0x2c] sm:$0xf]
    %v627 = vld [vmem:[%s11 + $0x30] sm:$0xf]
    %v628 = vld [vmem:[%s11 + $0x34] sm:$0xf]
    %v629 = vld [vmem:[%s11 + $0x38] sm:$0xf]
    %v630 = vld [vmem:[%s11 + $0x3c] sm:$0xf]
    %v631 = vld [vmem:[%s12] sm:$0x1]
    %v633 = vlaneseq
    %v634 = vshrl.u32 %v633, 7
    %v635 = vsub.s32 0, %v634
    %v636 = vrot.slane %v631, %v635
    %v654 = vunpack.c.l.b16 %v615
    %v655 = vunpack.c.l.b16 %v616
    %v656 = vunpack.c.l.b16 %v617
    %v657 = vunpack.c.l.b16 %v618
    %v658 = vunpack.c.l.b16 %v619
    %v659 = vunpack.c.l.b16 %v620
    %v660 = vunpack.c.l.b16 %v621
    %v661 = vunpack.c.l.b16 %v622
    %v662 = vunpack.c.l.b16 %v623
    %v663 = vunpack.c.l.b16 %v624
    %v664 = vunpack.c.l.b16 %v625
    %v665 = vunpack.c.l.b16 %v626
    %v666 = vunpack.c.l.b16 %v627
    %v667 = vunpack.c.l.b16 %v628
    %v668 = vunpack.c.l.b16 %v629
    %v669 = vunpack.c.l.b16 %v630
    %v670 = vpack.c.b16 %v655, %v654
    %v671 = vpack.c.b16 %v657, %v656
    %v672 = vpack.c.b16 %v659, %v658
    %v673 = vpack.c.b16 %v661, %v660
    %v674 = vpack.c.b16 %v663, %v662
    %v675 = vpack.c.b16 %v665, %v664
    %v676 = vpack.c.b16 %v667, %v666
    %v677 = vpack.c.b16 %v669, %v668
    %686 = vmatprep.subr.bf16.mxu0 0
    %687 = vmatpush1.bf16.msra.mxu0 %v670
    %688 = vmatprep.subr.bf16.mxu0 0
    %689 = vmatpush1.bf16.msra.mxu0 %v671
    %690 = vmatprep.subr.bf16.mxu0 0
    %691 = vmatpush1.bf16.msra.mxu0 %v672
    %692 = vmatprep.subr.bf16.mxu0 0
    %693 = vmatpush1.bf16.msra.mxu0 %v673
    %694 = vmatprep.subr.bf16.mxu0 0
    %695 = vmatpush1.bf16.msra.mxu0 %v674
    %696 = vmatprep.subr.bf16.mxu0 0
    %697 = vmatpush1.bf16.msra.mxu0 %v675
    %698 = vmatprep.subr.bf16.mxu0 0
    %699 = vmatpush1.bf16.msra.mxu0 %v676
    %700 = vmatprep.subr.bf16.mxu0 0
    %701 = vmatpush1.bf16.msra.mxu0 %v677
    %702 = vmatprep.subr.bf16.mxu0 0
    %703 = vmatpush1.bf16.msra.mxu0 0
    %704 = vmatprep.subr.bf16.mxu0 0
    %705 = vmatpush1.bf16.msra.mxu0 0
    %706 = vmatprep.subr.bf16.mxu0 0
    %707 = vmatpush1.bf16.msra.mxu0 0
    %708 = vmatprep.subr.bf16.mxu0 0
    %709 = vmatpush1.bf16.msra.mxu0 0
    %710 = vmatprep.subr.bf16.mxu0 0
    %711 = vmatpush1.bf16.msra.mxu0 0
    %712 = vmatprep.subr.bf16.mxu0 0
    %713 = vmatpush1.bf16.msra.mxu0 0
    %714 = vmatprep.subr.bf16.mxu0 0
    %715 = vmatpush1.bf16.msra.mxu0 0
    %716 = vmatprep.subr.bf16.mxu0 0
    %717 = vmatpush1.bf16.msra.mxu0 0
    %718 = vmatprep.mubr.bf16.mxu0 0
    %719 = vmatmul.mubr.bf16.gmra.mrb[0].mxu0 %v614
    %v720 = vpop.f32.mrb[0].mxu0
    %v721 = vadd.f32 %v636, %v720
    %v722 = vpop.f32.mrb[0].mxu0
    %v723 = vpop.f32.mrb[0].mxu0
    %v724 = vadd.f32 %v636, %v723
    %v725 = vpop.f32.mrb[0].mxu0
    %726 = vdwg.mxu0
    %v727 = vadd.f32 %v498, %v721
    %v728 = vadd.f32 %v499, %v724
    %s729 = scalar_lea.vmem %s2, 1
    %v730 = vld [vmem:[%s729] sm:$0x1]
    %s731 = scalar_lea.vmem %s3, 1
    %v732 = vld [vmem:[%s731] sm:$0x1]
    %v733 = vsel %vm64, %v727, 0.0
    %734 = vadd.xlane.f32.xlu0 %v733
    %v735 = vpop.xlane.xlu0 %734
    %v736 = vsel %vm64, %v728, 0.0
    %737 = vadd.xlane.f32.xlu0 %v736
    %v738 = vpop.xlane.xlu0 %737
    %v739 = vmul.f32 %v735, %v71
    %v740 = vmul.f32 %v738, %v71
    %v741 = vsub.f32 %v727, %v739
    %v742 = vsub.f32 %v728, %v740
    %v743 = vmul.f32 %v741, %v741
    %v744 = vmul.f32 %v742, %v742
    %v745 = vsel %vm64, %v743, 0.0
    %746 = vadd.xlane.f32.xlu0 %v745
    %v747 = vpop.xlane.xlu0 %746
    %v748 = vsel %vm64, %v744, 0.0
    %749 = vadd.xlane.f32.xlu0 %v748
    %v750 = vpop.xlane.xlu0 %749
    %v751 = vmul.f32 %v747, %v71
    %v752 = vmul.f32 %v750, %v71
    %v753 = vadd.f32 %v751, 1e-05
    %v754 = vadd.f32 %v752, 1e-05
    %v755 = vrsqrt.pop %v753
    %v756 = vrsqrt.pop %v754
    %v757 = vmul.f32 %v741, %v755
    %v758 = vmul.f32 %v742, %v756
    %v760 = vlaneseq
    %v761 = vshrl.u32 %v760, 7
    %v762 = vsub.s32 0, %v761
    %v763 = vrot.slane %v730, %v762
    %v765 = vmul.f32 %v757, %v763
    %v766 = vmul.f32 %v758, %v763
    %v768 = vlaneseq
    %v769 = vshrl.u32 %v768, 7
    %v770 = vsub.s32 0, %v769
    %v771 = vrot.slane %v732, %v770
    %v773 = vadd.f32 %v765, %v771
    %v774 = vadd.f32 %v766, %v771
    %v775 = vpack.c.bf16 %v774, %v773
    %s776 = scalar_lea.vmem %s4, 16
    %v777 = vld [vmem:[%s776] sm:$0xf]
    %v778 = vld [vmem:[%s776 + $0x4] sm:$0xf]
    %v779 = vld [vmem:[%s776 + $0x8] sm:$0xf]
    %v780 = vld [vmem:[%s776 + $0xc] sm:$0xf]
    %v785 = vunpack.c.l.b16 %v777
    %v786 = vunpack.c.l.b16 %v778
    %v787 = vunpack.c.l.b16 %v779
    %v788 = vunpack.c.l.b16 %v780
    %v789 = vpack.c.b16 %v786, %v785
    %v790 = vpack.c.b16 %v788, %v787
    %v794 = vsel %vm64, %v775, 0
    %796 = vmatprep.subr.bf16.mxu0 0
    %797 = vmatpush1.bf16.msra.mxu0 %v789
    %798 = vmatprep.subr.bf16.mxu0 0
    %799 = vmatpush1.bf16.msra.mxu0 %v790
    %800 = vmatprep.subr.bf16.mxu0 0
    %801 = vmatpush1.bf16.msra.mxu0 0
    %802 = vmatprep.subr.bf16.mxu0 0
    %803 = vmatpush1.bf16.msra.mxu0 0
    %804 = vmatprep.subr.bf16.mxu0 0
    %805 = vmatpush1.bf16.msra.mxu0 0
    %806 = vmatprep.subr.bf16.mxu0 0
    %807 = vmatpush1.bf16.msra.mxu0 0
    %808 = vmatprep.subr.bf16.mxu0 0
    %809 = vmatpush1.bf16.msra.mxu0 0
    %810 = vmatprep.subr.bf16.mxu0 0
    %811 = vmatpush1.bf16.msra.mxu0 0
    %812 = vmatprep.subr.bf16.mxu0 0
    %813 = vmatpush1.bf16.msra.mxu0 0
    %814 = vmatprep.subr.bf16.mxu0 0
    %815 = vmatpush1.bf16.msra.mxu0 0
    %816 = vmatprep.subr.bf16.mxu0 0
    %817 = vmatpush1.bf16.msra.mxu0 0
    %818 = vmatprep.subr.bf16.mxu0 0
    %819 = vmatpush1.bf16.msra.mxu0 0
    %820 = vmatprep.subr.bf16.mxu0 0
    %821 = vmatpush1.bf16.msra.mxu0 0
    %822 = vmatprep.subr.bf16.mxu0 0
    %823 = vmatpush1.bf16.msra.mxu0 0
    %824 = vmatprep.subr.bf16.mxu0 0
    %825 = vmatpush1.bf16.msra.mxu0 0
    %826 = vmatprep.subr.bf16.mxu0 0
    %827 = vmatpush1.bf16.msra.mxu0 0
    %828 = vmatprep.mubr.bf16.mxu0 0
    %829 = vmatmul.mubr.bf16.gmra.mrb[0].mxu0 %v794
    %v830 = vpop.f32.mrb[0].mxu0
    %v831 = vadd.f32 0.0, %v830
    %v832 = vpop.f32.mrb[0].mxu0
    %v833 = vpop.f32.mrb[0].mxu0
    %v834 = vadd.f32 0.0, %v833
    %v835 = vpop.f32.mrb[0].mxu0
    %836 = vdwg.mxu0
    %v837 = vpack.c.bf16 %v834, %v831
    %839 = vrot.lane.b32.xlu0 %v837, 96
    %v840 = vpop.permute.xlu0 %839
    %v842 = vsel %vm173, %v837, 0
    %v845 = vsel %vm173, %v840, 0
    %847 = vmatprep.subr.bf16.mxu0 0
    %848 = vmatpush1.bf16.xpose.msra.mxu0 %v845
    %849 = vmatprep.subr.bf16.mxu0 0
    %850 = vmatpush1.bf16.xpose.msra.mxu0 0
    %851 = vmatprep.subr.bf16.mxu0 0
    %852 = vmatpush1.bf16.xpose.msra.mxu0 0
    %853 = vmatprep.subr.bf16.mxu0 0
    %854 = vmatpush1.bf16.xpose.msra.mxu0 0
    %855 = vmatprep.subr.bf16.mxu0 0
    %856 = vmatpush1.bf16.xpose.msra.mxu0 0
    %857 = vmatprep.subr.bf16.mxu0 0
    %858 = vmatpush1.bf16.xpose.msra.mxu0 0
    %859 = vmatprep.subr.bf16.mxu0 0
    %860 = vmatpush1.bf16.xpose.msra.mxu0 0
    %861 = vmatprep.subr.bf16.mxu0 0
    %862 = vmatpush1.bf16.xpose.msra.mxu0 0
    %863 = vmatprep.subr.bf16.mxu0 0
    %864 = vmatpush1.bf16.xpose.msra.mxu0 0
    %865 = vmatprep.subr.bf16.mxu0 0
    %866 = vmatpush1.bf16.xpose.msra.mxu0 0
    %867 = vmatprep.subr.bf16.mxu0 0
    %868 = vmatpush1.bf16.xpose.msra.mxu0 0
    %869 = vmatprep.subr.bf16.mxu0 0
    %870 = vmatpush1.bf16.xpose.msra.mxu0 0
    %871 = vmatprep.subr.bf16.mxu0 0
    %872 = vmatpush1.bf16.xpose.msra.mxu0 0
    %873 = vmatprep.subr.bf16.mxu0 0
    %874 = vmatpush1.bf16.xpose.msra.mxu0 0
    %875 = vmatprep.subr.bf16.mxu0 0
    %876 = vmatpush1.bf16.xpose.msra.mxu0 0
    %877 = vmatprep.subr.bf16.mxu0 0
    %878 = vmatpush1.bf16.xpose.msra.mxu0 0
    %879 = vmatprep.mubr.bf16.mxu0 0
    %880 = vmatmul.mubr.bf16.gmra.mrb[0].mxu0 %v842
    %v881 = vpop.f32.mrb[0].mxu0
    %v882 = vadd.f32 0.0, %v881
    %v883 = vpop.f32.mrb[0].mxu0
    %v884 = vpop.f32.mrb[0].mxu0
    %v885 = vadd.f32 0.0, %v884
    %v886 = vpop.f32.mrb[0].mxu0
    %887 = vdwg.mxu0
    %v888 = vmul.f32 %v882, 0.17677669
    %v889 = vmul.f32 %v885, 0.17677669
    %v890 = vadd.f32 %v888, %v58
    %v891 = vadd.f32 %v889, %v59
    %v892 = vsel %vm173, %v890, -inf
    %893 = vmax.xlane.f32.xlu0 %v892
    %v894 = vpop.xlane.xlu0 %893
    %v895 = vsel %vm173, %v891, -inf
    %896 = vmax.xlane.f32.xlu0 %v895
    %v897 = vpop.xlane.xlu0 %896
    %v898 = vsub.f32 %v890, %v894
    %v899 = vsub.f32 %v891, %v897
    %v900 = vmul.f32 %v898, 1.442695
    %v901 = vpow.pop %v900
    %v902 = vmul.f32 %v899, 1.442695
    %v903 = vpow.pop %v902
    %v904 = vsel %vm173, %v901, 0.0
    %905 = vadd.xlane.f32.xlu0 %v904
    %v906 = vpop.xlane.xlu0 %905
    %v907 = vsel %vm173, %v903, 0.0
    %908 = vadd.xlane.f32.xlu0 %v907
    %v909 = vpop.xlane.xlu0 %908
    %v910 = vrcp.pop %v906
    %v911 = vrcp.pop %v909
    %v912 = vmul.f32 %v901, %v910
    %v913 = vmul.f32 %v903, %v911
    %v914 = vpack.c.bf16 %v913, %v912
    %915 = vrot.lane.b32.xlu0 %v837, 64
    %v916 = vpop.permute.xlu0 %915
    %v919 = vsel %vm173, %v914, 0
    %921 = vmatprep.subr.bf16.mxu0 0
    %922 = vmatpush1.bf16.msra.mxu0 %v916
    %923 = vmatprep.subr.bf16.mxu0 0
    %924 = vmatpush1.bf16.msra.mxu0 0
    %925 = vmatprep.subr.bf16.mxu0 0
    %926 = vmatpush1.bf16.msra.mxu0 0
    %927 = vmatprep.subr.bf16.mxu0 0
    %928 = vmatpush1.bf16.msra.mxu0 0
    %929 = vmatprep.subr.bf16.mxu0 0
    %930 = vmatpush1.bf16.msra.mxu0 0
    %931 = vmatprep.subr.bf16.mxu0 0
    %932 = vmatpush1.bf16.msra.mxu0 0
    %933 = vmatprep.subr.bf16.mxu0 0
    %934 = vmatpush1.bf16.msra.mxu0 0
    %935 = vmatprep.subr.bf16.mxu0 0
    %936 = vmatpush1.bf16.msra.mxu0 0
    %937 = vmatprep.subr.bf16.mxu0 0
    %938 = vmatpush1.bf16.msra.mxu0 0
    %939 = vmatprep.subr.bf16.mxu0 0
    %940 = vmatpush1.bf16.msra.mxu0 0
    %941 = vmatprep.subr.bf16.mxu0 0
    %942 = vmatpush1.bf16.msra.mxu0 0
    %943 = vmatprep.subr.bf16.mxu0 0
    %944 = vmatpush1.bf16.msra.mxu0 0
    %945 = vmatprep.subr.bf16.mxu0 0
    %946 = vmatpush1.bf16.msra.mxu0 0
    %947 = vmatprep.subr.bf16.mxu0 0
    %948 = vmatpush1.bf16.msra.mxu0 0
    %949 = vmatprep.subr.bf16.mxu0 0
    %950 = vmatpush1.bf16.msra.mxu0 0
    %951 = vmatprep.subr.bf16.mxu0 0
    %952 = vmatpush1.bf16.msra.mxu0 0
    %953 = vmatprep.mubr.bf16.mxu0 0
    %954 = vmatmul.mubr.bf16.gmra.mrb[0].mxu0 %v919
    %v955 = vpop.f32.mrb[0].mxu0
    %v956 = vadd.f32 0.0, %v955
    %v957 = vpop.f32.mrb[0].mxu0
    %v958 = vpop.f32.mrb[0].mxu0
    %v959 = vadd.f32 0.0, %v958
    %v960 = vpop.f32.mrb[0].mxu0
    %961 = vdwg.mxu0
    %962 = vrot.lane.b32.xlu0 %v837, 112
    %v963 = vpop.permute.xlu0 %962
    %964 = vrot.lane.b32.xlu0 %v837, 80
    %v965 = vpop.permute.xlu0 %964
    %v967 = vsel %vm173, %v963, 0
    %v970 = vsel %vm173, %v965, 0
    %972 = vmatprep.subr.bf16.mxu0 0
    %973 = vmatpush1.bf16.xpose.msra.mxu0 %v970
    %974 = vmatprep.subr.bf16.mxu0 0
    %975 = vmatpush1.bf16.xpose.msra.mxu0 0
    %976 = vmatprep.subr.bf16.mxu0 0
    %977 = vmatpush1.bf16.xpose.msra.mxu0 0
    %978 = vmatprep.subr.bf16.mxu0 0
    %979 = vmatpush1.bf16.xpose.msra.mxu0 0
    %980 = vmatprep.subr.bf16.mxu0 0
    %981 = vmatpush1.bf16.xpose.msra.mxu0 0
    %982 = vmatprep.subr.bf16.mxu0 0
    %983 = vmatpush1.bf16.xpose.msra.mxu0 0
    %984 = vmatprep.subr.bf16.mxu0 0
    %985 = vmatpush1.bf16.xpose.msra.mxu0 0
    %986 = vmatprep.subr.bf16.mxu0 0
    %987 = vmatpush1.bf16.xpose.msra.mxu0 0
    %988 = vmatprep.subr.bf16.mxu0 0
    %989 = vmatpush1.bf16.xpose.msra.mxu0 0
    %990 = vmatprep.subr.bf16.mxu0 0
    %991 = vmatpush1.bf16.xpose.msra.mxu0 0
    %992 = vmatprep.subr.bf16.mxu0 0
    %993 = vmatpush1.bf16.xpose.msra.mxu0 0
    %994 = vmatprep.subr.bf16.mxu0 0
    %995 = vmatpush1.bf16.xpose.msra.mxu0 0
    %996 = vmatprep.subr.bf16.mxu0 0
    %997 = vmatpush1.bf16.xpose.msra.mxu0 0
    %998 = vmatprep.subr.bf16.mxu0 0
    %999 = vmatpush1.bf16.xpose.msra.mxu0 0
    %1000 = vmatprep.subr.bf16.mxu0 0
    %1001 = vmatpush1.bf16.xpose.msra.mxu0 0
    %1002 = vmatprep.subr.bf16.mxu0 0
    %1003 = vmatpush1.bf16.xpose.msra.mxu0 0
    %1004 = vmatprep.mubr.bf16.mxu0 0
    %1005 = vmatmul.mubr.bf16.gmra.mrb[0].mxu0 %v967
    %v1006 = vpop.f32.mrb[0].mxu0
    %v1007 = vadd.f32 0.0, %v1006
    %v1008 = vpop.f32.mrb[0].mxu0
    %v1009 = vpop.f32.mrb[0].mxu0
    %v1010 = vadd.f32 0.0, %v1009
    %v1011 = vpop.f32.mrb[0].mxu0
    %1012 = vdwg.mxu0
    %v1013 = vmul.f32 %v1007, 0.17677669
    %v1014 = vmul.f32 %v1010, 0.17677669
    %v1015 = vadd.f32 %v1013, %v58
    %v1016 = vadd.f32 %v1014, %v59
    %v1017 = vsel %vm173, %v1015, -inf
    %1018 = vmax.xlane.f32.xlu0 %v1017
    %v1019 = vpop.xlane.xlu0 %1018
    %v1020 = vsel %vm173, %v1016, -inf
    %1021 = vmax.xlane.f32.xlu0 %v1020
    %v1022 = vpop.xlane.xlu0 %1021
    %v1023 = vsub.f32 %v1015, %v1019
    %v1024 = vsub.f32 %v1016, %v1022
    %v1025 = vmul.f32 %v1023, 1.442695
    %v1026 = vpow.pop %v1025
    %v1027 = vmul.f32 %v1024, 1.442695
    %v1028 = vpow.pop %v1027
    %v1029 = vsel %vm173, %v1026, 0.0
    %1030 = vadd.xlane.f32.xlu0 %v1029
    %v1031 = vpop.xlane.xlu0 %1030
    %v1032 = vsel %vm173, %v1028, 0.0
    %1033 = vadd.xlane.f32.xlu0 %v1032
    %v1034 = vpop.xlane.xlu0 %1033
    %v1035 = vrcp.pop %v1031
    %v1036 = vrcp.pop %v1034
    %v1037 = vmul.f32 %v1026, %v1035
    %v1038 = vmul.f32 %v1028, %v1036
    %v1039 = vpack.c.bf16 %v1038, %v1037
    %1040 = vrot.lane.b32.xlu0 %v837, 48
    %v1041 = vpop.permute.xlu0 %1040
    %v1044 = vsel %vm173, %v1039, 0
    %1046 = vmatprep.subr.bf16.mxu0 0
    %1047 = vmatpush1.bf16.msra.mxu0 %v1041
    %1048 = vmatprep.subr.bf16.mxu0 0
    %1049 = vmatpush1.bf16.msra.mxu0 0
    %1050 = vmatprep.subr.bf16.mxu0 0
    %1051 = vmatpush1.bf16.msra.mxu0 0
    %1052 = vmatprep.subr.bf16.mxu0 0
    %1053 = vmatpush1.bf16.msra.mxu0 0
    %1054 = vmatprep.subr.bf16.mxu0 0
    %1055 = vmatpush1.bf16.msra.mxu0 0
    %1056 = vmatprep.subr.bf16.mxu0 0
    %1057 = vmatpush1.bf16.msra.mxu0 0
    %1058 = vmatprep.subr.bf16.mxu0 0
    %1059 = vmatpush1.bf16.msra.mxu0 0
    %1060 = vmatprep.subr.bf16.mxu0 0
    %1061 = vmatpush1.bf16.msra.mxu0 0
    %1062 = vmatprep.subr.bf16.mxu0 0
    %1063 = vmatpush1.bf16.msra.mxu0 0
    %1064 = vmatprep.subr.bf16.mxu0 0
    %1065 = vmatpush1.bf16.msra.mxu0 0
    %1066 = vmatprep.subr.bf16.mxu0 0
    %1067 = vmatpush1.bf16.msra.mxu0 0
    %1068 = vmatprep.subr.bf16.mxu0 0
    %1069 = vmatpush1.bf16.msra.mxu0 0
    %1070 = vmatprep.subr.bf16.mxu0 0
    %1071 = vmatpush1.bf16.msra.mxu0 0
    %1072 = vmatprep.subr.bf16.mxu0 0
    %1073 = vmatpush1.bf16.msra.mxu0 0
    %1074 = vmatprep.subr.bf16.mxu0 0
    %1075 = vmatpush1.bf16.msra.mxu0 0
    %1076 = vmatprep.subr.bf16.mxu0 0
    %1077 = vmatpush1.bf16.msra.mxu0 0
    %1078 = vmatprep.mubr.bf16.mxu0 0
    %1079 = vmatmul.mubr.bf16.gmra.mrb[0].mxu0 %v1044
    %v1080 = vpop.f32.mrb[0].mxu0
    %v1081 = vadd.f32 0.0, %v1080
    %v1082 = vpop.f32.mrb[0].mxu0
    %v1083 = vpop.f32.mrb[0].mxu0
    %v1084 = vadd.f32 0.0, %v1083
    %v1085 = vpop.f32.mrb[0].mxu0
    %1086 = vdwg.mxu0
    %1089 = vrot.lane.b32.xlu0 %v1081, 16
    %v1090 = vpop.permute.xlu0 %1089
    %1091 = vrot.lane.b32.xlu0 %v1084, 16
    %v1092 = vpop.permute.xlu0 %1091
    %v1095 = vsel %vm173, %v956, %v1090
    %v1096 = vsel %vm173, %v959, %v1092
    %v1097 = vpack.c.bf16 %v1096, %v1095
    %s1098 = scalar_lea.vmem %s5, 16
    %v1099 = vld [vmem:[%s1098] sm:$0xf]
    %v1100 = vld [vmem:[%s1098 + $0x4] sm:$0xf]
    %v1101 = vld [vmem:[%s1098 + $0x8] sm:$0xf]
    %v1102 = vld [vmem:[%s1098 + $0xc] sm:$0xf]
    %s1103 = scalar_lea.vmem %s6, 1
    %v1104 = vld [vmem:[%s1103] sm:$0x1]
    %v1106 = vlaneseq
    %v1107 = vshrl.u32 %v1106, 7
    %v1108 = vsub.s32 0, %v1107
    %v1109 = vrot.slane %v1104, %v1108
    %v1115 = vunpack.c.l.b16 %v1099
    %v1116 = vunpack.c.l.b16 %v1100
    %v1117 = vunpack.c.l.b16 %v1101
    %v1118 = vunpack.c.l.b16 %v1102
    %v1119 = vpack.c.b16 %v1116, %v1115
    %v1120 = vpack.c.b16 %v1118, %v1117
    %v1124 = vsel %vm64, %v1097, 0
    %1126 = vmatprep.subr.bf16.mxu0 0
    %1127 = vmatpush1.bf16.msra.mxu0 %v1119
    %1128 = vmatprep.subr.bf16.mxu0 0
    %1129 = vmatpush1.bf16.msra.mxu0 %v1120
    %1130 = vmatprep.subr.bf16.mxu0 0
    %1131 = vmatpush1.bf16.msra.mxu0 0
    %1132 = vmatprep.subr.bf16.mxu0 0
    %1133 = vmatpush1.bf16.msra.mxu0 0
    %1134 = vmatprep.subr.bf16.mxu0 0
    %1135 = vmatpush1.bf16.msra.mxu0 0
    %1136 = vmatprep.subr.bf16.mxu0 0
    %1137 = vmatpush1.bf16.msra.mxu0 0
    %1138 = vmatprep.subr.bf16.mxu0 0
    %1139 = vmatpush1.bf16.msra.mxu0 0
    %1140 = vmatprep.subr.bf16.mxu0 0
    %1141 = vmatpush1.bf16.msra.mxu0 0
    %1142 = vmatprep.subr.bf16.mxu0 0
    %1143 = vmatpush1.bf16.msra.mxu0 0
    %1144 = vmatprep.subr.bf16.mxu0 0
    %1145 = vmatpush1.bf16.msra.mxu0 0
    %1146 = vmatprep.subr.bf16.mxu0 0
    %1147 = vmatpush1.bf16.msra.mxu0 0
    %1148 = vmatprep.subr.bf16.mxu0 0
    %1149 = vmatpush1.bf16.msra.mxu0 0
    %1150 = vmatprep.subr.bf16.mxu0 0
    %1151 = vmatpush1.bf16.msra.mxu0 0
    %1152 = vmatprep.subr.bf16.mxu0 0
    %1153 = vmatpush1.bf16.msra.mxu0 0
    %1154 = vmatprep.subr.bf16.mxu0 0
    %1155 = vmatpush1.bf16.msra.mxu0 0
    %1156 = vmatprep.subr.bf16.mxu0 0
    %1157 = vmatpush1.bf16.msra.mxu0 0
    %1158 = vmatprep.mubr.bf16.mxu0 0
    %1159 = vmatmul.mubr.bf16.gmra.mrb[0].mxu0 %v1124
    %v1160 = vpop.f32.mrb[0].mxu0
    %v1161 = vadd.f32 %v1109, %v1160
    %v1162 = vpop.f32.mrb[0].mxu0
    %v1163 = vpop.f32.mrb[0].mxu0
    %v1164 = vadd.f32 %v1109, %v1163
    %v1165 = vpop.f32.mrb[0].mxu0
    %1166 = vdwg.mxu0
    %v1167 = vadd.f32 %v727, %v1161
    %v1168 = vadd.f32 %v728, %v1164
    %s1169 = scalar_lea.vmem %s7, 1
    %v1170 = vld [vmem:[%s1169] sm:$0x1]
    %s1171 = scalar_lea.vmem %s8, 1
    %v1172 = vld [vmem:[%s1171] sm:$0x1]
    %v1173 = vsel %vm64, %v1167, 0.0
    %1174 = vadd.xlane.f32.xlu0 %v1173
    %v1175 = vpop.xlane.xlu0 %1174
    %v1176 = vsel %vm64, %v1168, 0.0
    %1177 = vadd.xlane.f32.xlu0 %v1176
    %v1178 = vpop.xlane.xlu0 %1177
    %v1179 = vmul.f32 %v1175, %v71
    %v1180 = vmul.f32 %v1178, %v71
    %v1181 = vsub.f32 %v1167, %v1179
    %v1182 = vsub.f32 %v1168, %v1180
    %v1183 = vmul.f32 %v1181, %v1181
    %v1184 = vmul.f32 %v1182, %v1182
    %v1185 = vsel %vm64, %v1183, 0.0
    %1186 = vadd.xlane.f32.xlu0 %v1185
    %v1187 = vpop.xlane.xlu0 %1186
    %v1188 = vsel %vm64, %v1184, 0.0
    %1189 = vadd.xlane.f32.xlu0 %v1188
    %v1190 = vpop.xlane.xlu0 %1189
    %v1191 = vmul.f32 %v1187, %v71
    %v1192 = vmul.f32 %v1190, %v71
    %v1193 = vadd.f32 %v1191, 1e-05
    %v1194 = vadd.f32 %v1192, 1e-05
    %v1195 = vrsqrt.pop %v1193
    %v1196 = vrsqrt.pop %v1194
    %v1197 = vmul.f32 %v1181, %v1195
    %v1198 = vmul.f32 %v1182, %v1196
    %v1200 = vlaneseq
    %v1201 = vshrl.u32 %v1200, 7
    %v1202 = vsub.s32 0, %v1201
    %v1203 = vrot.slane %v1170, %v1202
    %v1205 = vmul.f32 %v1197, %v1203
    %v1206 = vmul.f32 %v1198, %v1203
    %v1208 = vlaneseq
    %v1209 = vshrl.u32 %v1208, 7
    %v1210 = vsub.s32 0, %v1209
    %v1211 = vrot.slane %v1172, %v1210
    %v1213 = vadd.f32 %v1205, %v1211
    %v1214 = vadd.f32 %v1206, %v1211
    %v1215 = vpack.c.bf16 %v1214, %v1213
    %s1216 = scalar_lea.vmem %s9, 16
    %v1217 = vld [vmem:[%s1216] sm:$0xf]
    %v1218 = vld [vmem:[%s1216 + $0x4] sm:$0xf]
    %v1219 = vld [vmem:[%s1216 + $0x8] sm:$0xf]
    %v1220 = vld [vmem:[%s1216 + $0xc] sm:$0xf]
    %s1221 = scalar_lea.vmem %s10, 1
    %v1222 = vld [vmem:[%s1221] sm:$0x1]
    %v1224 = vlaneseq
    %v1225 = vshrl.u32 %v1224, 7
    %v1226 = vsub.s32 0, %v1225
    %v1227 = vrot.slane %v1222, %v1226
    %v1233 = vunpack.c.l.b16 %v1217
    %v1234 = vunpack.c.l.b16 %v1218
    %v1235 = vunpack.c.l.b16 %v1219
    %v1236 = vunpack.c.l.b16 %v1220
    %v1237 = vpack.c.b16 %v1234, %v1233
    %v1238 = vpack.c.b16 %v1236, %v1235
    %v1242 = vsel %vm64, %v1215, 0
    %1244 = vmatprep.subr.bf16.mxu0 0
    %1245 = vmatpush1.bf16.msra.mxu0 %v1237
    %1246 = vmatprep.subr.bf16.mxu0 0
    %1247 = vmatpush1.bf16.msra.mxu0 %v1238
    %1248 = vmatprep.subr.bf16.mxu0 0
    %1249 = vmatpush1.bf16.msra.mxu0 0
    %1250 = vmatprep.subr.bf16.mxu0 0
    %1251 = vmatpush1.bf16.msra.mxu0 0
    %1252 = vmatprep.subr.bf16.mxu0 0
    %1253 = vmatpush1.bf16.msra.mxu0 0
    %1254 = vmatprep.subr.bf16.mxu0 0
    %1255 = vmatpush1.bf16.msra.mxu0 0
    %1256 = vmatprep.subr.bf16.mxu0 0
    %1257 = vmatpush1.bf16.msra.mxu0 0
    %1258 = vmatprep.subr.bf16.mxu0 0
    %1259 = vmatpush1.bf16.msra.mxu0 0
    %1260 = vmatprep.subr.bf16.mxu0 0
    %1261 = vmatpush1.bf16.msra.mxu0 0
    %1262 = vmatprep.subr.bf16.mxu0 0
    %1263 = vmatpush1.bf16.msra.mxu0 0
    %1264 = vmatprep.subr.bf16.mxu0 0
    %1265 = vmatpush1.bf16.msra.mxu0 0
    %1266 = vmatprep.subr.bf16.mxu0 0
    %1267 = vmatpush1.bf16.msra.mxu0 0
    %1268 = vmatprep.subr.bf16.mxu0 0
    %1269 = vmatpush1.bf16.msra.mxu0 0
    %1270 = vmatprep.subr.bf16.mxu0 0
    %1271 = vmatpush1.bf16.msra.mxu0 0
    %1272 = vmatprep.subr.bf16.mxu0 0
    %1273 = vmatpush1.bf16.msra.mxu0 0
    %1274 = vmatprep.subr.bf16.mxu0 0
    %1275 = vmatpush1.bf16.msra.mxu0 0
    %1276 = vmatprep.mubr.bf16.mxu0 0
    %1277 = vmatmul.mubr.bf16.gmra.mrb[0].mxu0 %v1242
    %v1278 = vpop.f32.mrb[0].mxu0
    %v1279 = vadd.f32 %v1227, %v1278
    %v1280 = vpop.f32.mrb[0].mxu0
    %v1281 = vpop.f32.mrb[0].mxu0
    %v1282 = vadd.f32 %v1227, %v1281
    %v1283 = vpop.f32.mrb[0].mxu0
    %1284 = vdwg.mxu0
    %v1285 = vmax.f32 %v1279, 0.0
    %v1286 = vmax.f32 %v1282, 0.0
    %v1287 = vpack.c.bf16 %v1286, %v1285
    %s1288 = scalar_lea.vmem %s11, 64
    %v1289 = vld [vmem:[%s1288] sm:$0xf]
    %v1290 = vld [vmem:[%s1288 + $0x4] sm:$0xf]
    %v1291 = vld [vmem:[%s1288 + $0x8] sm:$0xf]
    %v1292 = vld [vmem:[%s1288 + $0xc] sm:$0xf]
    %v1293 = vld [vmem:[%s1288 + $0x10] sm:$0xf]
    %v1294 = vld [vmem:[%s1288 + $0x14] sm:$0xf]
    %v1295 = vld [vmem:[%s1288 + $0x18] sm:$0xf]
    %v1296 = vld [vmem:[%s1288 + $0x1c] sm:$0xf]
    %v1297 = vld [vmem:[%s1288 + $0x20] sm:$0xf]
    %v1298 = vld [vmem:[%s1288 + $0x24] sm:$0xf]
    %v1299 = vld [vmem:[%s1288 + $0x28] sm:$0xf]
    %v1300 = vld [vmem:[%s1288 + $0x2c] sm:$0xf]
    %v1301 = vld [vmem:[%s1288 + $0x30] sm:$0xf]
    %v1302 = vld [vmem:[%s1288 + $0x34] sm:$0xf]
    %v1303 = vld [vmem:[%s1288 + $0x38] sm:$0xf]
    %v1304 = vld [vmem:[%s1288 + $0x3c] sm:$0xf]
    %s1305 = scalar_lea.vmem %s12, 1
    %v1306 = vld [vmem:[%s1305] sm:$0x1]
    %v1308 = vlaneseq
    %v1309 = vshrl.u32 %v1308, 7
    %v1310 = vsub.s32 0, %v1309
    %v1311 = vrot.slane %v1306, %v1310
    %v1329 = vunpack.c.l.b16 %v1289
    %v1330 = vunpack.c.l.b16 %v1290
    %v1331 = vunpack.c.l.b16 %v1291
    %v1332 = vunpack.c.l.b16 %v1292
    %v1333 = vunpack.c.l.b16 %v1293
    %v1334 = vunpack.c.l.b16 %v1294
    %v1335 = vunpack.c.l.b16 %v1295
    %v1336 = vunpack.c.l.b16 %v1296
    %v1337 = vunpack.c.l.b16 %v1297
    %v1338 = vunpack.c.l.b16 %v1298
    %v1339 = vunpack.c.l.b16 %v1299
    %v1340 = vunpack.c.l.b16 %v1300
    %v1341 = vunpack.c.l.b16 %v1301
    %v1342 = vunpack.c.l.b16 %v1302
    %v1343 = vunpack.c.l.b16 %v1303
    %v1344 = vunpack.c.l.b16 %v1304
    %v1345 = vpack.c.b16 %v1330, %v1329
    %v1346 = vpack.c.b16 %v1332, %v1331
    %v1347 = vpack.c.b16 %v1334, %v1333
    %v1348 = vpack.c.b16 %v1336, %v1335
    %v1349 = vpack.c.b16 %v1338, %v1337
    %v1350 = vpack.c.b16 %v1340, %v1339
    %v1351 = vpack.c.b16 %v1342, %v1341
    %v1352 = vpack.c.b16 %v1344, %v1343
    %1361 = vmatprep.subr.bf16.mxu0 0
    %1362 = vmatpush1.bf16.msra.mxu0 %v1345
    %1363 = vmatprep.subr.bf16.mxu0 0
    %1364 = vmatpush1.bf16.msra.mxu0 %v1346
    %1365 = vmatprep.subr.bf16.mxu0 0
    %1366 = vmatpush1.bf16.msra.mxu0 %v1347
    %1367 = vmatprep.subr.bf16.mxu0 0
    %1368 = vmatpush1.bf16.msra.mxu0 %v1348
    %1369 = vmatprep.subr.bf16.mxu0 0
    %1370 = vmatpush1.bf16.msra.mxu0 %v1349
    %1371 = vmatprep.subr.bf16.mxu0 0
    %1372 = vmatpush1.bf16.msra.mxu0 %v1350
    %1373 = vmatprep.subr.bf16.mxu0 0
    %1374 = vmatpush1.bf16.msra.mxu0 %v1351
    %1375 = vmatprep.subr.bf16.mxu0 0
    %1376 = vmatpush1.bf16.msra.mxu0 %v1352
    %1377 = vmatprep.subr.bf16.mxu0 0
    %1378 = vmatpush1.bf16.msra.mxu0 0
    %1379 = vmatprep.subr.bf16.mxu0 0
    %1380 = vmatpush1.bf16.msra.mxu0 0
    %1381 = vmatprep.subr.bf16.mxu0 0
    %1382 = vmatpush1.bf16.msra.mxu0 0
    %1383 = vmatprep.subr.bf16.mxu0 0
    %1384 = vmatpush1.bf16.msra.mxu0 0
    %1385 = vmatprep.subr.bf16.mxu0 0
    %1386 = vmatpush1.bf16.msra.mxu0 0
    %1387 = vmatprep.subr.bf16.mxu0 0
    %1388 = vmatpush1.bf16.msra.mxu0 0
    %1389 = vmatprep.subr.bf16.mxu0 0
    %1390 = vmatpush1.bf16.msra.mxu0 0
    %1391 = vmatprep.subr.bf16.mxu0 0
    %1392 = vmatpush1.bf16.msra.mxu0 0
    %1393 = vmatprep.mubr.bf16.mxu0 0
    %1394 = vmatmul.mubr.bf16.gmra.mrb[0].mxu0 %v1287
    %v1395 = vpop.f32.mrb[0].mxu0
    %v1396 = vadd.f32 %v1311, %v1395
    %v1397 = vpop.f32.mrb[0].mxu0
    %v1398 = vpop.f32.mrb[0].mxu0
    %v1399 = vadd.f32 %v1311, %v1398
    %v1400 = vpop.f32.mrb[0].mxu0
    %1401 = vdwg.mxu0
    %v1402 = vadd.f32 %v1167, %v1396
    %v1403 = vadd.f32 %v1168, %v1399
    %v1404 = vld [vmem:[%s13] sm:$0x1]
    %v1405 = vld [vmem:[%s14] sm:$0x1]
    %v1406 = vsel %vm64, %v1402, 0.0
    %1407 = vadd.xlane.f32.xlu0 %v1406
    %v1408 = vpop.xlane.xlu0 %1407
    %v1409 = vsel %vm64, %v1403, 0.0
    %1410 = vadd.xlane.f32.xlu0 %v1409
    %v1411 = vpop.xlane.xlu0 %1410
    %v1412 = vmul.f32 %v1408, %v71
    %v1413 = vmul.f32 %v1411, %v71
    %v1414 = vsub.f32 %v1402, %v1412
    %v1415 = vsub.f32 %v1403, %v1413
    %v1416 = vmul.f32 %v1414, %v1414
    %v1417 = vmul.f32 %v1415, %v1415
    %v1418 = vsel %vm64, %v1416, 0.0
    %1419 = vadd.xlane.f32.xlu0 %v1418
    %v1420 = vpop.xlane.xlu0 %1419
    %v1421 = vsel %vm64, %v1417, 0.0
    %1422 = vadd.xlane.f32.xlu0 %v1421
    %v1423 = vpop.xlane.xlu0 %1422
    %v1424 = vmul.f32 %v1420, %v71
    %v1425 = vmul.f32 %v1423, %v71
    %v1426 = vadd.f32 %v1424, 1e-05
    %v1427 = vadd.f32 %v1425, 1e-05
    %v1428 = vrsqrt.pop %v1426
    %v1429 = vrsqrt.pop %v1427
    %v1430 = vmul.f32 %v1414, %v1428
    %v1431 = vmul.f32 %v1415, %v1429
    %v1433 = vlaneseq
    %v1434 = vshrl.u32 %v1433, 7
    %v1435 = vsub.s32 0, %v1434
    %v1436 = vrot.slane %v1404, %v1435
    %v1438 = vmul.f32 %v1430, %v1436
    %v1439 = vmul.f32 %v1431, %v1436
    %v1441 = vlaneseq
    %v1442 = vshrl.u32 %v1441, 7
    %v1443 = vsub.s32 0, %v1442
    %v1444 = vrot.slane %v1405, %v1443
    %v1446 = vadd.f32 %v1438, %v1444
    %v1447 = vadd.f32 %v1439, %v1444
    %v1448 = vpack.c.bf16 %v1447, %v1446
    %v1449 = vld [vmem:[%s15] sm:$0xf]
    %v1450 = vld [vmem:[%s15 + $0x4] sm:$0xf]
    %v1451 = vld [vmem:[%s15 + $0x8] sm:$0xf]
    %v1452 = vld [vmem:[%s15 + $0xc] sm:$0xf]
    %v1453 = vld [vmem:[%s16] sm:$0x1]
    %v1455 = vlaneseq
    %v1456 = vshrl.u32 %v1455, 7
    %v1457 = vsub.s32 0, %v1456
    %v1458 = vrot.slane %v1453, %v1457
    %v1464 = vunpack.c.l.b16 %v1449
    %v1465 = vunpack.c.l.b16 %v1450
    %v1466 = vunpack.c.l.b16 %v1451
    %v1467 = vunpack.c.l.b16 %v1452
    %v1468 = vpack.c.b16 %v1465, %v1464
    %v1469 = vpack.c.b16 %v1467, %v1466
    %v1473 = vsel %vm64, %v1448, 0
    %1475 = vmatprep.subr.bf16.mxu0 0
    %1476 = vmatpush1.bf16.msra.mxu0 %v1468
    %1477 = vmatprep.subr.bf16.mxu0 0
    %1478 = vmatpush1.bf16.msra.mxu0 %v1469
    %1479 = vmatprep.subr.bf16.mxu0 0
    %1480 = vmatpush1.bf16.msra.mxu0 0
    %1481 = vmatprep.subr.bf16.mxu0 0
    %1482 = vmatpush1.bf16.msra.mxu0 0
    %1483 = vmatprep.subr.bf16.mxu0 0
    %1484 = vmatpush1.bf16.msra.mxu0 0
    %1485 = vmatprep.subr.bf16.mxu0 0
    %1486 = vmatpush1.bf16.msra.mxu0 0
    %1487 = vmatprep.subr.bf16.mxu0 0
    %1488 = vmatpush1.bf16.msra.mxu0 0
    %1489 = vmatprep.subr.bf16.mxu0 0
    %1490 = vmatpush1.bf16.msra.mxu0 0
    %1491 = vmatprep.subr.bf16.mxu0 0
    %1492 = vmatpush1.bf16.msra.mxu0 0
    %1493 = vmatprep.subr.bf16.mxu0 0
    %1494 = vmatpush1.bf16.msra.mxu0 0
    %1495 = vmatprep.subr.bf16.mxu0 0
    %1496 = vmatpush1.bf16.msra.mxu0 0
    %1497 = vmatprep.subr.bf16.mxu0 0
    %1498 = vmatpush1.bf16.msra.mxu0 0
    %1499 = vmatprep.subr.bf16.mxu0 0
    %1500 = vmatpush1.bf16.msra.mxu0 0
    %1501 = vmatprep.subr.bf16.mxu0 0
    %1502 = vmatpush1.bf16.msra.mxu0 0
    %1503 = vmatprep.subr.bf16.mxu0 0
    %1504 = vmatpush1.bf16.msra.mxu0 0
    %1505 = vmatprep.subr.bf16.mxu0 0
    %1506 = vmatpush1.bf16.msra.mxu0 0
    %1507 = vmatprep.mubr.bf16.mxu0 0
    %1508 = vmatmul.mubr.bf16.gmra.mrb[0].mxu0 %v1473
    %v1509 = vpop.f32.mrb[0].mxu0
    %v1510 = vadd.f32 %v1458, %v1509
    %v1511 = vpop.f32.mrb[0].mxu0
    %v1512 = vpop.f32.mrb[0].mxu0
    %v1513 = vadd.f32 %v1458, %v1512
    %v1514 = vpop.f32.mrb[0].mxu0
    %1515 = vdwg.mxu0
    %1516 = vst [vmem:[#allocation2] sm:$0xff] %v1510
    %1517 = vst [vmem:[#allocation2 + $0x8] sm:$0xff] %v1513
    // Predicated region
    $region70: #{tpu_custom_call.1} parent=1 // pred_check
      _
    $region71: #{tpu_custom_call.1} parent=1 // pred_check_branch
      %1519 = sbr.rel (0) target = $region73
    $region72: #{tpu_custom_call.1} parent=1 // pred_region
      %s1521 = ssub.s32 256, 256
      %1522 = vsyncadd [#allocation3], %s1521
      %s1523 = sshll.u32 [#allocation2], 4
      %s1524 = int_to_ptr.vmem [resolvable:$true] %s1523
      %1529 = dma.vmem_to_hbm [thread:$0]  %s1524, 256, %s17, [#allocation3], 128, 128, 8
    $region73: #{tpu_custom_call.1} parent=1 // pred_fallthru
      _
    // Predicated region
    $region74: #{tpu_custom_call.1} parent=1 // pred_check
      _
    $region75: #{tpu_custom_call.1} parent=1 // pred_check_branch
      %1531 = sbr.rel (0) target = $region77
    $region76: #{tpu_custom_call.1} parent=1 // pred_region
      %1532 = dma.done [#allocation3], 256
    $region77: #{tpu_custom_call.1} parent=1 // pred_fallthru
      _
    %1533 = vsyncpa [#allocation3], 1

</llo_original>
